<compile_context>
chip_gen: v5e
topology: v5e:2x2
jax: 0.10.0
libtpu: 0.0.40
codegen_flags: <defaults>
</compile_context>

<pallas_src>
import functools

import jax
import jax.numpy as jnp
from jax import lax
from jax.experimental import pallas as pl
from jax.experimental.pallas import tpu as pltpu


def _round_up(x, m):
    return ((x + m - 1) // m) * m


def _fused_currents_kernel(xg_ref, xn_ref, yp_ref, out_ref, acc_ref, *,
                           inv_sig2, tm, tn, slab):
    """One (row-tile i, col-tile j) step of the fused symmetric currents sum.

    xg_ref : (tm, 8)   augmented x geometry  [x0,x1,x2, ||x||^2, 1, 0,0,0]
    xn_ref : (tm, 8)   x normals zero-padded to 8
    yp_ref : (16, tn)  packed y side: rows 0:8 geometry [-2y; 1; ||y||^2; 0...],
                       rows 8:16 normals (transposed, zero-padded)
    out_ref: (1, 8, 128) per-row-tile partial energy (broadcast scalar)
    acc_ref: (1, tn)   running per-lane accumulator (VMEM scratch)

    Symmetry weights: w(p,q) = 2 (q > p), 1 (q == p), 0 (q < p), so that
      sum_{p,q} f = sum_{p,q} w(p,q) f(p,q)    for symmetric f.
    """
    i = pl.program_id(0)
    j = pl.program_id(1)
    row0 = i * tm
    col0 = j * tn
    n_slabs = tn // slab

    @pl.when(j == 0)
    def _():
        acc_ref[...] = jnp.zeros_like(acc_ref)

    def run_tile(diag):
        xg = xg_ref[...]                                    # (tm, 8)
        xn = xn_ref[...]                                    # (tm, 8)

        def body(s, carry):
            off = pl.multiple_of(s * slab, slab)
            yg = yp_ref[:8, pl.ds(off, slab)]               # (8, slab)
            yn = yp_ref[8:, pl.ds(off, slab)]               # (8, slab)

            # MXU: squared distances via the augmented matmul + normal dots.
            d2 = jnp.maximum(
                jnp.dot(xg, yg, preferred_element_type=jnp.float32), 0.0)
            nd = jnp.dot(xn, yn, preferred_element_type=jnp.float32)

            # EUP: approximate reciprocal for the Cauchy kernel (forward only).
            kern = pl.reciprocal(1.0 + d2 * inv_sig2, approx=True)
            contrib = kern * nd                             # (tm, slab)

            if diag:
                # Element-exact triangular weights (only diagonal-straddling tiles).
                rows = lax.broadcasted_iota(jnp.int32, (tm, slab), 0) + row0
                cols = lax.broadcasted_iota(jnp.int32, (tm, slab), 1) + (col0 + off)
                diff = cols - rows
                w = jnp.where(diff > 0, 2.0, jnp.where(diff == 0, 1.0, 0.0))
                contrib = contrib * w

            part = jnp.sum(contrib, axis=0, keepdims=True)  # (1, slab) sublane reduce
            if not diag:
                part = part * 2.0                           # strictly-upper tile
            acc_ref[:, pl.ds(off, slab)] += part
            return carry

        lax.fori_loop(0, n_slabs, body, 0, unroll=True)

    # Column tile strictly above this row tile's diagonal band: uniform x2.
    @pl.when(col0 >= row0 + tm)
    def _():
        run_tile(diag=False)

    # Column tile straddling the diagonal: per-element triangular weights.
    @pl.when(jnp.logical_and(col0 < row0 + tm, col0 + tn > row0))
    def _():
        run_tile(diag=True)

    # Tiles entirely below the diagonal are skipped (no compute issued).

    @pl.when(j == pl.num_programs(1) - 1)
    def _():
        out_ref[...] = jnp.zeros_like(out_ref) + jnp.sum(acc_ref[...])


def currents_self_energy(centers, normals, sigma, *, tm=512, tn=4096, slab=512):
    """E = sum_{p,q} k(c_p, c_q) * <n_p, n_q>  (Cauchy kernel), on TPU via Pallas."""
    n = int(centers.shape[0])

    # --- tile selection -------------------------------------------------------
    n8 = _round_up(n, 8)
    tm = min(tm, n8)
    if n8 >= 16:
        # Keep >= 2 row tiles so both TensorCores of a v7x chip get work
        # (row axis is the only "parallel" dimension).
        tm = min(tm, _round_up(n8 // 2, 8))
    tn = min(tn, _round_up(n, 128))
    slab = min(slab, tn)
    while tn % slab != 0:        # tn is a multiple of 128, so this terminates at 128
        slab //= 2

    n_pad = _round_up(n, tm)
    m_pad = _round_up(n, tn)
    n_tiles = n_pad // tm
    m_tiles = m_pad // tn

    # --- operand preparation --------------------------------------------------
    c = centers.astype(jnp.float32)
    nv = normals.astype(jnp.float32)
    # Distances are translation invariant: center the cloud so the
    # ||x||^2 + ||y||^2 - 2 x.y formulation avoids catastrophic cancellation.
    c = c - jnp.mean(c, axis=0, keepdims=True)

    c2 = jnp.sum(c * c, axis=1, keepdims=True)              # (n, 1)
    ones = jnp.ones((n, 1), jnp.float32)
    zpad3 = jnp.zeros((n, 3), jnp.float32)
    zpad5 = jnp.zeros((n, 5), jnp.float32)

    # xg @ yg^T = ||x||^2 + ||y||^2 - 2 x.y   (contraction depth K = 8)
    xg = jnp.concatenate([c, c2, ones, zpad3], axis=1)          # (n, 8)
    xn = jnp.concatenate([nv, zpad5], axis=1)                   # (n, 8)
    yg = jnp.concatenate([-2.0 * c, ones, c2, zpad3], axis=1)   # (n, 8)

    # Zero-pad rows/cols; padded normals are zero so they contribute exactly 0.
    xg_p = jnp.zeros((n_pad, 8), jnp.float32).at[:n].set(xg)
    xn_p = jnp.zeros((n_pad, 8), jnp.float32).at[:n].set(xn)
    # Pack y geometry + normals into one (16, m_pad) stream: one DMA per step.
    yp = jnp.zeros((16, m_pad), jnp.float32)
    yp = yp.at[:8, :n].set(yg.T)
    yp = yp.at[8:, :n].set(xn.T)

    kernel = functools.partial(
        _fused_currents_kernel,
        inv_sig2=float(1.0 / (sigma * sigma)), tm=tm, tn=tn, slab=slab)

    # --- advisory cost estimate (counts the per-step y refetch) ---------------
    eval_tiles = sum(1 for ti in range(n_tiles) for tj in range(m_tiles)
                     if tj * tn + tn > ti * tm)
    pairs_eval = eval_tiles * tm * tn
    cost = pl.CostEstimate(
        flops=int(pairs_eval * (2 * 2 * 8 + 6)),             # two K=8 matmuls + pointwise
        transcendentals=int(pairs_eval),                     # one reciprocal per pair
        bytes_accessed=int(4 * (2 * n_tiles * tm * 8         # x tiles: once per row tile
                                + n_tiles * m_tiles * 16 * tn  # y tile refetched each step
                                + n_tiles * 8 * 128)),
    )

    out = pl.pallas_call(
        kernel,
        out_shape=jax.ShapeDtypeStruct((n_tiles, 8, 128), jnp.float32),
        grid=(n_tiles, m_tiles),
        in_specs=[
            pl.BlockSpec((tm, 8), lambda i, j: (i, 0)),      # x geometry row tile
            pl.BlockSpec((tm, 8), lambda i, j: (i, 0)),      # x normals  row tile
            pl.BlockSpec((16, tn), lambda i, j: (0, j)),     # packed y   col tile
        ],
        out_specs=pl.BlockSpec((1, 8, 128), lambda i, j: (i, 0, 0)),
        scratch_shapes=[pltpu.VMEM((1, tn), jnp.float32)],
        compiler_params=pltpu.CompilerParams(
            dimension_semantics=("parallel", "arbitrary"),
            # Cap below v7x's 64 MiB physical VMEM; the actual footprint is far
            # smaller because the (tm, slab) intermediates are bounded by the
            # in-kernel slab loop (inputs + scratch are a few hundred KiB).
            vmem_limit_bytes=48 * 1024 * 1024,
        ),
        cost_estimate=cost,
    )(xg_p, xn_p, yp)

    return jnp.sum(out[:, 0, 0])


def affine_currents_forward(affine, translation, src_normals, src_centers,
                            tar_normals, tar_centers, sigma, *, tm=512, tn=4096):
    """Forward pass of AffineCurrents (scalar energy)."""
    affine = affine.astype(jnp.float32)
    translation = translation.astype(jnp.float32)
    src_normals = src_normals.astype(jnp.float32)
    src_centers = src_centers.astype(jnp.float32)
    tar_normals = tar_normals.astype(jnp.float32)
    tar_centers = tar_centers.astype(jnp.float32)

    # Tiny 3x3 algebra: plain JAX glue (not worth a kernel).
    ns = jnp.linalg.det(affine) * jnp.linalg.inv(affine).T
    mean = src_centers.mean(axis=0)
    ut = mean + translation
    src_nrm_sc = (ns @ src_normals.T).T
    src_cnt_tf = (affine @ (src_centers - mean).T).T + ut

    # Fused symmetric currents energy:
    #   X = [S; T], N = [nS; -nT]  =>  sum_{pq} k(X_p,X_q) <N_p,N_q>
    #                                = <S,S> - 2<S,T> + <T,T>
    centers = jnp.concatenate([src_cnt_tf, tar_centers], axis=0)
    normals = jnp.concatenate([src_nrm_sc, -tar_normals], axis=0)
    return currents_self_energy(centers, normals, sigma, tm=tm, tn=tn)


def affine_currents_forward_ref(affine, translation, src_normals, src_centers,
                                tar_normals, tar_centers, sigma):
    """Pure-JAX reference for numerical validation (direct (x-y)^2 formulation)."""
    affine = affine.astype(jnp.float32)
    ns = jnp.linalg.det(affine) * jnp.linalg.inv(affine).T
    mean = src_centers.mean(axis=0)
    ut = mean + translation
    sn = (ns @ src_normals.T).T
    sc = (affine @ (src_centers - mean).T).T + ut

    def term(xc, xn, yc, yn):
        d2 = jnp.sum((xc[:, None, :] - yc[None, :, :]) ** 2, axis=-1)
        nd = xn @ yn.T
        return jnp.sum(nd / (1.0 + d2 / sigma ** 2))

    return (term(sc, sn, sc, sn)
            - 2.0 * term(sc, sn, tar_centers, tar_normals)
            + term(tar_centers, tar_normals, tar_centers, tar_normals))


if __name__ == "__main__":
    key = jax.random.PRNGKey(0)
    k1, k2, k3, k4, k5, k6 = jax.random.split(key, 6)

    n_src, n_tar = 200, 160
    sigma = 0.5

    src_centers = jax.random.normal(k1, (n_src, 3), jnp.float32)
    src_normals = jax.random.normal(k2, (n_src, 3), jnp.float32) * 0.1
    tar_centers = jax.random.normal(k3, (n_tar, 3), jnp.float32)
    tar_normals = jax.random.normal(k4, (n_tar, 3), jnp.float32) * 0.1

    # Mirrors the module's identity/zero defaults, perturbed so the affine path
    # is exercised non-trivially.
    affine = jnp.eye(3, dtype=jnp.float32) + 0.05 * jax.random.normal(k5, (3, 3), jnp.float32)
    translation = 0.1 * jax.random.normal(k6, (3,), jnp.float32)

    energy_ref = affine_currents_forward_ref(affine, translation, src_normals, src_centers,
                                             tar_normals, tar_centers, sigma)
    energy_ref = jax.block_until_ready(energy_ref)
    ref = float(energy_ref)
    # Tolerance accounts for the approximate EUP reciprocal and the augmented
    # distance formulation (both well below 0.5% here).
    tol = 5e-3 * max(1.0, abs(ref))

    # Default (large) tiles: two row tiles, one column tile, diagonal-straddle
    # path with a multi-slab inner loop.
    energy = affine_currents_forward(affine, translation, src_normals, src_centers,
                                     tar_normals, tar_centers, sigma)
    energy = jax.block_until_ready(energy)
    err = abs(float(energy) - ref)
    assert err <= tol, f"mismatch (default tiles): pallas={float(energy)} ref={ref} err={err}"

    # Small tiles: exercises many row/col tiles, the lower-triangle skip, and the
    # uniform x2 strictly-upper path of the symmetric kernel.
    energy_small = affine_currents_forward(affine, translation, src_normals, src_centers,
                                           tar_normals, tar_centers, sigma, tm=64, tn=128)
    energy_small = jax.block_until_ready(energy_small)
    err_small = abs(float(energy_small) - ref)
    assert err_small <= tol, (
        f"mismatch (small tiles): pallas={float(energy_small)} ref={ref} err={err_small}")

    # TODO(synk): pl.reciprocal(approx=True) is forward-accuracy only; switch to
    # approx=False (or a Newton step) if this kernel is differentiated later.
    print("KERNEL_OK")
</pallas_src>

<mosaic_0001>
module attributes {stable_mosaic.version = 11 : i64} {
  func.func @_fused_currents_kernel(%arg0: i32, %arg1: i32, %arg2: memref<184x8xf32, #tpu.memory_space<vmem>>, %arg3: memref<184x8xf32, #tpu.memory_space<vmem>>, %arg4: memref<16x384xf32, #tpu.memory_space<vmem>>, %arg5: memref<1x8x128xf32, #tpu.memory_space<vmem>>, %arg6: memref<1x384xf32, #tpu.memory_space<vmem>>) attributes {dimension_semantics = [#tpu.dimension_semantics<parallel>, #tpu.dimension_semantics<arbitrary>], iteration_bounds = array<i64: 2, 1>, scalar_prefetch = 0 : i64, scratch_operands = 1 : i64, tpu.core_type = #tpu.core_type<tc>, window_params = [{transform_indices = @transform_0, window_bounds = array<i64: 184, 8>}, {transform_indices = @transform_1, window_bounds = array<i64: 184, 8>}, {transform_indices = @transform_2, window_bounds = array<i64: 16, 384>}, {transform_indices = @transform_3, window_bounds = array<i64: 1, 8, 128>}]} {
    %c184_i32 = arith.constant 184 : i32
    %0 = arith.muli %arg0, %c184_i32 : i32
    %c384_i32 = arith.constant 384 : i32
    %1 = arith.muli %arg1, %c384_i32 : i32
    %c0_i32 = arith.constant 0 : i32
    %2 = arith.cmpi eq, %arg1, %c0_i32 : i32
    %3 = arith.extui %2 : i1 to i32
    %c0_i32_0 = arith.constant 0 : i32
    %4 = arith.cmpi ne, %3, %c0_i32_0 : i32
    scf.if %4 {
      %cst = arith.constant 0.000000e+00 : f32
      %19 = vector.broadcast %cst : f32 to vector<1x384xf32>
      %c0 = arith.constant 0 : index
      %c0_8 = arith.constant 0 : index
      %20 = vector.load %arg6[%c0, %c0_8] : memref<1x384xf32, #tpu.memory_space<vmem>>, vector<1x384xf32>
      tpu.vector_store %arg6[%c0, %c0_8], %19 {strides = array<i32>} : memref<1x384xf32, #tpu.memory_space<vmem>>, vector<1x384xf32>,
    } else {
    }
    %c184_i32_1 = arith.constant 184 : i32
    %5 = arith.addi %0, %c184_i32_1 : i32
    %6 = arith.cmpi sge, %1, %5 : i32
    %7 = arith.extui %6 : i1 to i32
    %c0_i32_2 = arith.constant 0 : i32
    %8 = arith.cmpi ne, %7, %c0_i32_2 : i32
    scf.if %8 {
      %c0 = arith.constant 0 : index
      %c0_8 = arith.constant 0 : index
      %19 = vector.load %arg2[%c0, %c0_8] : memref<184x8xf32, #tpu.memory_space<vmem>>, vector<184x8xf32>
      %c0_9 = arith.constant 0 : index
      %c0_10 = arith.constant 0 : index
      %20 = vector.load %arg3[%c0_9, %c0_10] : memref<184x8xf32, #tpu.memory_space<vmem>>, vector<184x8xf32>
      %c0_i32_11 = arith.constant 0 : i32
      %c384_i32_12 = arith.constant 384 : i32
      %21 = arith.muli %c0_i32_11, %c384_i32_12 : i32
      %22 = tpu.assume_multiple %21, 384 : i32
      %c0_13 = arith.constant 0 : index
      %23 = arith.index_cast %22 : i32 to index
      %24 = vector.load %arg4[%c0_13, %23] : memref<16x384xf32, #tpu.memory_space<vmem>>, vector<8x384xf32>
      %c8 = arith.constant 8 : index
      %25 = arith.index_cast %22 : i32 to index
      %26 = vector.load %arg4[%c8, %25] : memref<16x384xf32, #tpu.memory_space<vmem>>, vector<8x384xf32>
      %cst = arith.constant dense<0.000000e+00> : vector<184x384xf32>
      %27 = tpu.matmul %19, %24, %cst {dimension_numbers = #tpu.dot_dimension_numbers<[1], [0], [0], [1], [0, 0, 1, 1], [], []>} : vector<184x8xf32>, vector<8x384xf32>, vector<184x384xf32> -> vector<184x384xf32>
      %cst_14 = arith.constant 0.000000e+00 : f32
      %28 = vector.broadcast %cst_14 : f32 to vector<184x384xf32>
      %29 = arith.maximumf %27, %28 : vector<184x384xf32>
      %cst_15 = arith.constant dense<0.000000e+00> : vector<184x384xf32>
      %30 = tpu.matmul %20, %26, %cst_15 {dimension_numbers = #tpu.dot_dimension_numbers<[1], [0], [0], [1], [0, 0, 1, 1], [], []>} : vector<184x8xf32>, vector<8x384xf32>, vector<184x384xf32> -> vector<184x384xf32>
      %cst_16 = arith.constant 4.000000e+00 : f32
      %31 = vector.broadcast %cst_16 : f32 to vector<184x384xf32>
      %32 = arith.mulf %29, %31 : vector<184x384xf32>
      %cst_17 = arith.constant 1.000000e+00 : f32
      %33 = vector.broadcast %cst_17 : f32 to vector<184x384xf32>
      %34 = arith.addf %33, %32 : vector<184x384xf32>
      %35 = tpu.reciprocal %34 {approx = true} : vector<184x384xf32> -> vector<184x384xf32>
      %36 = arith.mulf %35, %30 : vector<184x384xf32>
      %cst_18 = arith.constant dense<0.000000e+00> : vector<384xf32>
      %37 = vector.multi_reduction <add>, %36, %cst_18 [0] : vector<184x384xf32> to vector<384xf32>
      %38 = vector.shape_cast %37 : vector<384xf32> to vector<1x384xf32>
      %cst_19 = arith.constant 2.000000e+00 : f32
      %39 = vector.broadcast %cst_19 : f32 to vector<1x384xf32>
      %40 = arith.mulf %38, %39 : vector<1x384xf32>
      %c0_20 = arith.constant 0 : index
      %41 = arith.index_cast %22 : i32 to index
      %42 = vector.load %arg6[%c0_20, %41] : memref<1x384xf32, #tpu.memory_space<vmem>>, vector<1x384xf32>
      %43 = arith.addf %42, %40 : vector<1x384xf32>
      %c0_21 = arith.constant 0 : index
      %44 = arith.index_cast %22 : i32 to index
      %45 = vector.load %arg6[%c0_21, %44] : memref<1x384xf32, #tpu.memory_space<vmem>>, vector<1x384xf32>
      tpu.vector_store %arg6[%c0_21, %44], %43 {strides = array<i32>} : memref<1x384xf32, #tpu.memory_space<vmem>>, vector<1x384xf32>,
      %c1_i32 = arith.constant 1 : i32
    } else {
    }
    %c184_i32_3 = arith.constant 184 : i32
    %9 = arith.addi %0, %c184_i32_3 : i32
    %10 = arith.cmpi slt, %1, %9 : i32
    %c384_i32_4 = arith.constant 384 : i32
    %11 = arith.addi %1, %c384_i32_4 : i32
    %12 = arith.cmpi sgt, %11, %0 : i32
    %13 = arith.andi %10, %12 : i1
    %14 = arith.extui %13 : i1 to i32
    %c0_i32_5 = arith.constant 0 : i32
    %15 = arith.cmpi ne, %14, %c0_i32_5 : i32
    scf.if %15 {
      %c0 = arith.constant 0 : index
      %c0_8 = arith.constant 0 : index
      %19 = vector.load %arg2[%c0, %c0_8] : memref<184x8xf32, #tpu.memory_space<vmem>>, vector<184x8xf32>
      %c0_9 = arith.constant 0 : index
      %c0_10 = arith.constant 0 : index
      %20 = vector.load %arg3[%c0_9, %c0_10] : memref<184x8xf32, #tpu.memory_space<vmem>>, vector<184x8xf32>
      %c0_i32_11 = arith.constant 0 : i32
      %c384_i32_12 = arith.constant 384 : i32
      %21 = arith.muli %c0_i32_11, %c384_i32_12 : i32
      %22 = tpu.assume_multiple %21, 384 : i32
      %c0_13 = arith.constant 0 : index
      %23 = arith.index_cast %22 : i32 to index
      %24 = vector.load %arg4[%c0_13, %23] : memref<16x384xf32, #tpu.memory_space<vmem>>, vector<8x384xf32>
      %c8 = arith.constant 8 : index
      %25 = arith.index_cast %22 : i32 to index
      %26 = vector.load %arg4[%c8, %25] : memref<16x384xf32, #tpu.memory_space<vmem>>, vector<8x384xf32>
      %cst = arith.constant dense<0.000000e+00> : vector<184x384xf32>
      %27 = tpu.matmul %19, %24, %cst {dimension_numbers = #tpu.dot_dimension_numbers<[1], [0], [0], [1], [0, 0, 1, 1], [], []>} : vector<184x8xf32>, vector<8x384xf32>, vector<184x384xf32> -> vector<184x384xf32>
      %cst_14 = arith.constant 0.000000e+00 : f32
      %28 = vector.broadcast %cst_14 : f32 to vector<184x384xf32>
      %29 = arith.maximumf %27, %28 : vector<184x384xf32>
      %cst_15 = arith.constant dense<0.000000e+00> : vector<184x384xf32>
      %30 = tpu.matmul %20, %26, %cst_15 {dimension_numbers = #tpu.dot_dimension_numbers<[1], [0], [0], [1], [0, 0, 1, 1], [], []>} : vector<184x8xf32>, vector<8x384xf32>, vector<184x384xf32> -> vector<184x384xf32>
      %cst_16 = arith.constant 4.000000e+00 : f32
      %31 = vector.broadcast %cst_16 : f32 to vector<184x384xf32>
      %32 = arith.mulf %29, %31 : vector<184x384xf32>
      %cst_17 = arith.constant 1.000000e+00 : f32
      %33 = vector.broadcast %cst_17 : f32 to vector<184x384xf32>
      %34 = arith.addf %33, %32 : vector<184x384xf32>
      %35 = tpu.reciprocal %34 {approx = true} : vector<184x384xf32> -> vector<184x384xf32>
      %36 = arith.mulf %35, %30 : vector<184x384xf32>
      %37 = tpu.iota {dimensions = array<i32: 0>} : vector<184x384xi32>
      %38 = vector.broadcast %0 : i32 to vector<184x384xi32>
      %39 = arith.addi %37, %38 : vector<184x384xi32>
      %40 = tpu.iota {dimensions = array<i32: 1>} : vector<184x384xi32>
      %41 = arith.addi %1, %22 : i32
      %42 = vector.broadcast %41 : i32 to vector<184x384xi32>
      %43 = arith.addi %40, %42 : vector<184x384xi32>
      %44 = arith.subi %43, %39 : vector<184x384xi32>
      %c0_i32_18 = arith.constant 0 : i32
      %45 = vector.broadcast %c0_i32_18 : i32 to vector<184x384xi32>
      %46 = arith.cmpi sgt, %44, %45 : vector<184x384xi32>
      %c0_i32_19 = arith.constant 0 : i32
      %47 = vector.broadcast %c0_i32_19 : i32 to vector<184x384xi32>
      %48 = arith.cmpi eq, %44, %47 : vector<184x384xi32>
      %cst_20 = arith.constant 1.000000e+00 : f32
      %cst_21 = arith.constant 0.000000e+00 : f32
      %49 = vector.broadcast %cst_20 : f32 to vector<184x384xf32>
      %50 = vector.broadcast %cst_21 : f32 to vector<184x384xf32>
      %51 = arith.select %48, %49, %50 : vector<184x384xi1>, vector<184x384xf32>
      %cst_22 = arith.constant 2.000000e+00 : f32
      %52 = vector.broadcast %cst_22 : f32 to vector<184x384xf32>
      %53 = arith.select %46, %52, %51 : vector<184x384xi1>, vector<184x384xf32>
      %54 = arith.mulf %36, %53 : vector<184x384xf32>
      %cst_23 = arith.constant dense<0.000000e+00> : vector<384xf32>
      %55 = vector.multi_reduction <add>, %54, %cst_23 [0] : vector<184x384xf32> to vector<384xf32>
      %56 = vector.shape_cast %55 : vector<384xf32> to vector<1x384xf32>
      %c0_24 = arith.constant 0 : index
      %57 = arith.index_cast %22 : i32 to index
      %58 = vector.load %arg6[%c0_24, %57] : memref<1x384xf32, #tpu.memory_space<vmem>>, vector<1x384xf32>
      %59 = arith.addf %58, %56 : vector<1x384xf32>
      %c0_25 = arith.constant 0 : index
      %60 = arith.index_cast %22 : i32 to index
      %61 = vector.load %arg6[%c0_25, %60] : memref<1x384xf32, #tpu.memory_space<vmem>>, vector<1x384xf32>
      tpu.vector_store %arg6[%c0_25, %60], %59 {strides = array<i32>} : memref<1x384xf32, #tpu.memory_space<vmem>>, vector<1x384xf32>,
      %c1_i32 = arith.constant 1 : i32
    } else {
    }
    %c0_i32_6 = arith.constant 0 : i32
    %16 = arith.cmpi eq, %arg1, %c0_i32_6 : i32
    %17 = arith.extui %16 : i1 to i32
    %c0_i32_7 = arith.constant 0 : i32
    %18 = arith.cmpi ne, %17, %c0_i32_7 : i32
    scf.if %18 {
      %cst = arith.constant 0.000000e+00 : f32
      %19 = vector.broadcast %cst : f32 to vector<1x8x128xf32>
      %c0 = arith.constant 0 : index
      %c0_8 = arith.constant 0 : index
      %20 = vector.load %arg6[%c0, %c0_8] : memref<1x384xf32, #tpu.memory_space<vmem>>, vector<1x384xf32>
      %21 = vector.shape_cast %20 : vector<1x384xf32> to vector<1x1x384xf32>
      %cst_9 = arith.constant dense<0.000000e+00> : vector<1xf32>
      %22 = vector.multi_reduction <add>, %21, %cst_9 [1, 2] : vector<1x1x384xf32> to vector<1xf32>
      %23 = vector.shape_cast %22 : vector<1xf32> to vector<1x1x1xf32>
      %24 = vector.extract %23[0, 0, 0] : f32 from vector<1x1x1xf32>
      %25 = vector.broadcast %24 : f32 to vector<1x8x128xf32>
      %26 = arith.addf %19, %25 : vector<1x8x128xf32>
      %c0_10 = arith.constant 0 : index
      %c0_11 = arith.constant 0 : index
      %c0_12 = arith.constant 0 : index
      %27 = vector.load %arg5[%c0_10, %c0_11, %c0_12] : memref<1x8x128xf32, #tpu.memory_space<vmem>>, vector<1x8x128xf32>
      tpu.vector_store %arg5[%c0_10, %c0_11, %c0_12], %26 {strides = array<i32>} : memref<1x8x128xf32, #tpu.memory_space<vmem>>, vector<1x8x128xf32>,
    } else {
    }
    return
  }
  func.func @transform_0(%arg0: i32, %arg1: i32) -> (i32, i32) {
    %c0_i32 = arith.constant 0 : i32
    %c0_i32_0 = arith.constant 0 : i32
    return %arg0, %c0_i32 : i32, i32
  }
  func.func @transform_1(%arg0: i32, %arg1: i32) -> (i32, i32) {
    %c0_i32 = arith.constant 0 : i32
    %c0_i32_0 = arith.constant 0 : i32
    return %arg0, %c0_i32 : i32, i32
  }
  func.func @transform_2(%arg0: i32, %arg1: i32) -> (i32, i32) {
    %c0_i32 = arith.constant 0 : i32
    %c0_i32_0 = arith.constant 0 : i32
    return %c0_i32, %arg1 : i32, i32
  }
  func.func @transform_3(%arg0: i32, %arg1: i32) -> (i32, i32, i32) {
    %c0_i32 = arith.constant 0 : i32
    %c0_i32_0 = arith.constant 0 : i32
    %c0_i32_1 = arith.constant 0 : i32
    return %arg0, %c0_i32, %c0_i32_0 : i32, i32, i32
  }
}

</mosaic_0001>

<llo_original>
// kernel: tpu_custom_call.1
$region0: #{tpu_custom_call.1}
  #allocation0 [shape = 'u32[]', space=smem, size = 0x4, offset = 0x4, fixed_abs, tag = 'smem constant byte address 0x4 - core index']
  #allocation1 [shape = 'u32[72,128]{1,0:T(1,128)}', space=vmem, size = 0x9000, scoped, tag = 'internal scratch']
  #allocation2 [shape = 'f32[1,384]{1,0:T(1,128)}', space=vmem, size = 0x600, scoped, tag = 'scratch operand']
  %s0 = inlined_call_operand.vmem [shape: f32[368,8], index: 0, kind: input, shape index: {}]
  %s1 = inlined_call_operand.vmem [shape: f32[368,8], index: 1, kind: input, shape index: {}]
  %s2 = inlined_call_operand.vmem [shape: f32[16,384], index: 2, kind: input, shape index: {}]
  %s3 = inlined_call_operand.hbm [shape: f32[2,8,128], index: 3, kind: output, shape index: {}]
  %s4 = sld [smem:[#allocation0]]
  $region61: #{tpu_custom_call.1} parent=0
    _
  %s6 = ssub.s32 1, %s4
  %s7 = scalar_select 0, %s6, %s4
  $region1: #{tpu_custom_call.1} parent=0
    #allocation3 [shape = 'u8[8192]{0}', space=vmem, size = 0x2000, scoped, tag = 'output window, operand 0']
    #allocation4 [shape = 's32[2]{0}', space=sflag, size = 0x8, scoped, tag = 'scoped memory for tpu_custom_call.1']
    %8 = vsyncpa [#allocation4], 0
    %s9 = scalar_lea.sflag [#allocation4], 1
    %10 = vsyncpa %s9, 0
    loop: start=0, step=1, limit=4
    $region2: #{tpu_custom_call.1} parent=1 // loop_pre_header
      _
    $region3: #{tpu_custom_call.1} parent=1 // loop_header
      %s12 = sphi 0, %s16
      %p13 = scmp.ge.s32.totalorder %s12, 4
      %s19 = sphi 0, %s31
      %s20 = sphi 0, %s27
      %s21 = sphi 0, %s19
      %s22 = sphi 0, %s20
      %s23 = sphi 0, %s21
      %s24 = sphi 0, %s22
      %s34 = sphi 0, %s36
      %s37 = sphi 0, %s34
      %s38 = sphi 0, %s37
      %s54 = sphi 0, %s38
      %s60 = sphi 0, %s62
      %s63 = sphi 0, %s60
      %s64 = sphi 0, %s63
      %s80 = sphi 0, %s64
      %s86 = sphi 0, %s88
      %s89 = sphi 0, %s86
      %s90 = sphi 0, %s89
      %s106 = sphi 0, %s90
      %s112 = sphi 0, %s114
      %s115 = sphi 0, %s112
      %s116 = sphi 0, %s115
      %s132 = sphi 0, %s116
    $region4: #{tpu_custom_call.1} parent=1 // loop_header_branch
      %15 = sbr.rel (%p13) target = $region8
    $region5: #{tpu_custom_call.1} parent=1 // loop_body
      %s17 = ssub.s32 %s12, 1
      %s18 = ssub.s32 %s12, 2
      %s25 = sadd.s32 1, %s20
      %p26 = scmp.ge.s32.totalorder %s25, 1
      %s27 = scalar_select %p26, 0, %s25
      %s28 = sadd.s32 1, %s19
      %s29 = scalar_select %p26, %s28, %s19
      %p30 = scmp.ge.s32.totalorder %s29, 2
      %s31 = scalar_select %p30, 0, %s29
      %s32 = ssub.s32 %s19, %s31
      %p33 = scmp.eq.s32.totalorder %s32, 0
      %s35 = sadd.s32 %s34, 1
      %s36 = scalar_select %p33, %s34, %s35
      %p39 = pneg %p33
      %p40 = scmp.eq.s32.totalorder %s12, 1
      %p41 = por %p39, %p40
      %p42 = scmp.ne.s32.totalorder %s34, %s37
      %p43 = scmp.eq.s32.totalorder %s12, 0
      %p44 = por %p42, %p43
      %p45 = scmp.ne.s32.totalorder %s34, %s37
      %p46 = scmp.eq.s32.totalorder %s17, 1
      %p47 = por %p45, %p46
      %p48 = scmp.ne.s32.totalorder %s37, %s38
      %p49 = scmp.eq.s32.totalorder %s17, 0
      %p50 = por %p48, %p49
      %p51 = scmp.ne.s32.totalorder %s37, %s38
      %p52 = scmp.eq.s32.totalorder %s18, 1
      %p53 = por %p51, %p52
      %p55 = scmp.ne.s32.totalorder %s38, %s54
      %p56 = scmp.eq.s32.totalorder %s18, 0
      %p57 = por %p55, %p56
      %s58 = ssub.s32 %s19, %s31
      %p59 = scmp.eq.s32.totalorder %s58, 0
      %s61 = sadd.s32 %s60, 1
      %s62 = scalar_select %p59, %s60, %s61
      %p65 = pneg %p59
      %p66 = scmp.eq.s32.totalorder %s12, 1
      %p67 = por %p65, %p66
      %p68 = scmp.ne.s32.totalorder %s60, %s63
      %p69 = scmp.eq.s32.totalorder %s12, 0
      %p70 = por %p68, %p69
      %p71 = scmp.ne.s32.totalorder %s60, %s63
      %p72 = scmp.eq.s32.totalorder %s17, 1
      %p73 = por %p71, %p72
      %p74 = scmp.ne.s32.totalorder %s63, %s64
      %p75 = scmp.eq.s32.totalorder %s17, 0
      %p76 = por %p74, %p75
      %p77 = scmp.ne.s32.totalorder %s63, %s64
      %p78 = scmp.eq.s32.totalorder %s18, 1
      %p79 = por %p77, %p78
      %p81 = scmp.ne.s32.totalorder %s64, %s80
      %p82 = scmp.eq.s32.totalorder %s18, 0
      %p83 = por %p81, %p82
      %s84 = ssub.s32 %s20, %s27
      %p85 = scmp.eq.s32.totalorder %s84, 0
      %s87 = sadd.s32 %s86, 1
      %s88 = scalar_select %p85, %s86, %s87
      %p91 = pneg %p85
      %p92 = scmp.eq.s32.totalorder %s12, 1
      %p93 = por %p91, %p92
      %p94 = scmp.ne.s32.totalorder %s86, %s89
      %p95 = scmp.eq.s32.totalorder %s12, 0
      %p96 = por %p94, %p95
      %p97 = scmp.ne.s32.totalorder %s86, %s89
      %p98 = scmp.eq.s32.totalorder %s17, 1
      %p99 = por %p97, %p98
      %p100 = scmp.ne.s32.totalorder %s89, %s90
      %p101 = scmp.eq.s32.totalorder %s17, 0
      %p102 = por %p100, %p101
      %p103 = scmp.ne.s32.totalorder %s89, %s90
      %p104 = scmp.eq.s32.totalorder %s18, 1
      %p105 = por %p103, %p104
      %p107 = scmp.ne.s32.totalorder %s90, %s106
      %p108 = scmp.eq.s32.totalorder %s18, 0
      %p109 = por %p107, %p108
      %s110 = ssub.s32 %s19, %s31
      %p111 = scmp.eq.s32.totalorder %s110, 0
      %s113 = sadd.s32 %s112, 1
      %s114 = scalar_select %p111, %s112, %s113
      %p117 = pneg %p111
      %p118 = scmp.eq.s32.totalorder %s12, 1
      %p119 = por %p117, %p118
      %p120 = scmp.ne.s32.totalorder %s112, %s115
      %p121 = scmp.eq.s32.totalorder %s12, 0
      %p122 = por %p120, %p121
      %p123 = scmp.ne.s32.totalorder %s112, %s115
      %p124 = scmp.eq.s32.totalorder %s17, 1
      %p125 = por %p123, %p124
      %p126 = scmp.ne.s32.totalorder %s115, %s116
      %p127 = scmp.eq.s32.totalorder %s17, 0
      %p128 = por %p126, %p127
      %p129 = scmp.ne.s32.totalorder %s115, %s116
      %p130 = scmp.eq.s32.totalorder %s18, 1
      %p131 = por %p129, %p130
      %p133 = scmp.ne.s32.totalorder %s116, %s132
      %p134 = scmp.eq.s32.totalorder %s18, 0
      %p135 = por %p133, %p134
      %p136 = scmp.le.s32.totalorder 1, %s12
      %p137 = scmp.lt.s32.totalorder %s12, 3
      %p138 = pnand %p136, %p137
      %p139 = pneg %p138
      // Predicated region
      $region9: #{tpu_custom_call.1} parent=5 // pred_check
        _
      $region10: #{tpu_custom_call.1} parent=5 // pred_check_branch
        %141 = sbr.rel (%p138) target = $region12
      $region11: #{tpu_custom_call.1} parent=5 // pred_region
        %s142 = ssub.s32 %s12, 1
        // Predicated region
        $region13: #{tpu_custom_call.1} parent=11 // pred_check
          %p143 = pneg %p102
        $region14: #{tpu_custom_call.1} parent=11 // pred_check_branch
          %145 = sbr.rel (%p143) target = $region16
        $region15: #{tpu_custom_call.1} parent=11 // pred_region
          %s146 = smul.u32 3, %s22
          %p147 = scmp.lt.s32.totalorder %s146, 2
          %s148 = scalar_select %p147, %s146, 2
          %s149 = smul.addr %s148, 8
          %s150 = scalar_lea.vmem %s2, %s149
          %s151 = smul.u32 3, %s22
        $region16: #{tpu_custom_call.1} parent=11 // pred_fallthru
          _
      $region12: #{tpu_custom_call.1} parent=5 // pred_fallthru
        _
      %p152 = scmp.lt.s32.totalorder %s12, 2
      // Predicated region
      $region17: #{tpu_custom_call.1} parent=5 // pred_check
        %p153 = pneg %p152
      $region18: #{tpu_custom_call.1} parent=5 // pred_check_branch
        %155 = sbr.rel (%p153) target = $region20
      $region19: #{tpu_custom_call.1} parent=5 // pred_region
        // Predicated region
        $region21: #{tpu_custom_call.1} parent=19 // pred_check
          %p156 = pneg %p44
        $region22: #{tpu_custom_call.1} parent=19 // pred_check_branch
          %158 = sbr.rel (%p156) target = $region24
        $region23: #{tpu_custom_call.1} parent=19 // pred_region
          %s159 = smul.u32 23, %s19
          %p160 = scmp.lt.s32.totalorder %s159, 45
          %s161 = scalar_select %p160, %s159, 45
          %s162 = smul.addr %s161, 8
          %s163 = scalar_lea.vmem %s0, %s162
          %s164 = smul.u32 23, %s19
        $region24: #{tpu_custom_call.1} parent=19 // pred_fallthru
          _
        // Predicated region
        $region25: #{tpu_custom_call.1} parent=19 // pred_check
          %p165 = pneg %p70
        $region26: #{tpu_custom_call.1} parent=19 // pred_check_branch
          %167 = sbr.rel (%p165) target = $region28
        $region27: #{tpu_custom_call.1} parent=19 // pred_region
          %s168 = smul.u32 23, %s19
          %p169 = scmp.lt.s32.totalorder %s168, 45
          %s170 = scalar_select %p169, %s168, 45
          %s171 = smul.addr %s170, 8
          %s172 = scalar_lea.vmem %s1, %s171
          %s173 = smul.u32 23, %s19
        $region28: #{tpu_custom_call.1} parent=19 // pred_fallthru
          _
      $region20: #{tpu_custom_call.1} parent=5 // pred_fallthru
        _
      %p174 = scmp.le.s32.totalorder 1, %s12
      %p175 = scmp.lt.s32.totalorder %s12, 3
      %p176 = pnand %p174, %p175
      %p177 = pneg %p176
      // Predicated region
      $region29: #{tpu_custom_call.1} parent=5 // pred_check
        _
      $region30: #{tpu_custom_call.1} parent=5 // pred_check_branch
        %179 = sbr.rel (%p176) target = $region32
      $region31: #{tpu_custom_call.1} parent=5 // pred_region
        %s180 = ssub.s32 %s12, 1
        %s181 = smul.u32 23, %s21
        %p182 = scmp.lt.s32.totalorder %s181, 45
        %s183 = scalar_select %p182, %s181, 45
        %s184 = smul.addr %s183, 8
        %s185 = scalar_lea.vmem %s0, %s184
        %p186 = pneg %p50
        %p187 = pneg %p47
        %s188 = smul.u32 23, %s21
        %p189 = scmp.lt.s32.totalorder %s188, 45
        %s190 = scalar_select %p189, %s188, 45
        %s191 = smul.addr %s190, 8
        %s192 = scalar_lea.vmem %s1, %s191
        %p193 = pneg %p76
        %p194 = pneg %p73
        %s195 = smul.u32 3, %s22
        %p196 = scmp.lt.s32.totalorder %s195, 2
        %s197 = scalar_select %p196, %s195, 2
        %s198 = smul.addr %s197, 8
        %s199 = scalar_lea.vmem %s2, %s198
        %p200 = pneg %p102
        %p201 = pneg %p99
        %p202 = pneg %p128
        %p203 = pneg %p125
        %s204 = sand.u32 %s115, 1
        %s205 = scalar_lea.sflag [#allocation4], %s204
        %s206 = sand.u32 %s115, 1
        %s207 = smul.addr %s206, 8
        %s208 = scalar_lea.vmem [#allocation3], %s207
        %s209 = smul.u32 23, %s21
        %p210 = scmp.lt.s32.totalorder %s209, 45
        %s211 = scalar_select %p210, %s209, 45
        %s212 = smul.addr %s211, 8
        %s213 = scalar_lea.vmem %s0, %s212
        %s214 = smul.u32 23, %s21
        %s215 = smul.u32 23, %s21
        %p216 = scmp.lt.s32.totalorder %s215, 45
        %s217 = scalar_select %p216, %s215, 45
        %s218 = smul.addr %s217, 8
        %s219 = scalar_lea.vmem %s1, %s218
        %s220 = smul.u32 23, %s21
        %s221 = smul.u32 3, %s22
        %p222 = scmp.lt.s32.totalorder %s221, 2
        %s223 = scalar_select %p222, %s221, 2
        %s224 = smul.addr %s223, 8
        %s225 = scalar_lea.vmem %s2, %s224
        %s226 = smul.u32 3, %s22
        %s227 = smul.u32 %s21, 184
        %s228 = smul.u32 %s22, 384
        %p229 = scmp.eq.s32.totalorder %s22, 0
        // Predicated region
        $region33: #{tpu_custom_call.1} parent=31 // pred_check
          %p230 = pneg %p229
        $region34: #{tpu_custom_call.1} parent=31 // pred_check_branch
          %232 = sbr.rel (%p230) target = $region36
        $region35: #{tpu_custom_call.1} parent=31 // pred_region
          %v233 = vlaneseq
          %vm234 = vcmp.ge.s32.totalorder %v233, 0
          %vm235 = vcmp.lt.s32.totalorder %v233, 384
          %vm236 = vmand %vm234, %vm235
          %237 = vst.msk [vmem:[#allocation2] sm:$0x7] %vm236, 0.0
        $region36: #{tpu_custom_call.1} parent=31 // pred_fallthru
          _
        %s238 = sadd.s32 %s227, 184
        %p239 = scmp.ge.s32.totalorder %s228, %s238
        // Predicated region
        $region37: #{tpu_custom_call.1} parent=31 // pred_check
          %p240 = pneg %p239
        $region38: #{tpu_custom_call.1} parent=31 // pred_check_branch
          %242 = sbr.rel (%p240) target = $region40
        $region39: #{tpu_custom_call.1} parent=31 // pred_region
          %v243 = vld [vmem:[%s213] sm:$0xff]
          %v244 = vld [vmem:[%s213 + $0x8] sm:$0xff]
          %v245 = vld [vmem:[%s213 + $0x10] sm:$0xff]
          %v246 = vld [vmem:[%s213 + $0x18] sm:$0xff]
          %v247 = vld [vmem:[%s213 + $0x20] sm:$0xff]
          %v248 = vld [vmem:[%s213 + $0x28] sm:$0xff]
          %v249 = vld [vmem:[%s213 + $0x30] sm:$0xff]
          %v250 = vld [vmem:[%s213 + $0x38] sm:$0xff]
          %v251 = vld [vmem:[%s213 + $0x40] sm:$0xff]
          %v252 = vld [vmem:[%s213 + $0x48] sm:$0xff]
          %v253 = vld [vmem:[%s213 + $0x50] sm:$0xff]
          %v254 = vld [vmem:[%s213 + $0x58] sm:$0xff]
          %v255 = vld [vmem:[%s213 + $0x60] sm:$0xff]
          %v256 = vld [vmem:[%s213 + $0x68] sm:$0xff]
          %v257 = vld [vmem:[%s213 + $0x70] sm:$0xff]
          %v258 = vld [vmem:[%s213 + $0x78] sm:$0xff]
          %v259 = vld [vmem:[%s213 + $0x80] sm:$0xff]
          %v260 = vld [vmem:[%s213 + $0x88] sm:$0xff]
          %v261 = vld [vmem:[%s213 + $0x90] sm:$0xff]
          %v262 = vld [vmem:[%s213 + $0x98] sm:$0xff]
          %v263 = vld [vmem:[%s213 + $0xa0] sm:$0xff]
          %v264 = vld [vmem:[%s213 + $0xa8] sm:$0xff]
          %v265 = vld [vmem:[%s213 + $0xb0] sm:$0xff]
          %v266 = vld [vmem:[%s219] sm:$0xff]
          %v267 = vld [vmem:[%s219 + $0x8] sm:$0xff]
          %v268 = vld [vmem:[%s219 + $0x10] sm:$0xff]
          %v269 = vld [vmem:[%s219 + $0x18] sm:$0xff]
          %v270 = vld [vmem:[%s219 + $0x20] sm:$0xff]
          %v271 = vld [vmem:[%s219 + $0x28] sm:$0xff]
          %v272 = vld [vmem:[%s219 + $0x30] sm:$0xff]
          %v273 = vld [vmem:[%s219 + $0x38] sm:$0xff]
          %v274 = vld [vmem:[%s219 + $0x40] sm:$0xff]
          %v275 = vld [vmem:[%s219 + $0x48] sm:$0xff]
          %v276 = vld [vmem:[%s219 + $0x50] sm:$0xff]
          %v277 = vld [vmem:[%s219 + $0x58] sm:$0xff]
          %v278 = vld [vmem:[%s219 + $0x60] sm:$0xff]
          %v279 = vld [vmem:[%s219 + $0x68] sm:$0xff]
          %v280 = vld [vmem:[%s219 + $0x70] sm:$0xff]
          %v281 = vld [vmem:[%s219 + $0x78] sm:$0xff]
          %v282 = vld [vmem:[%s219 + $0x80] sm:$0xff]
          %v283 = vld [vmem:[%s219 + $0x88] sm:$0xff]
          %v284 = vld [vmem:[%s219 + $0x90] sm:$0xff]
          %v285 = vld [vmem:[%s219 + $0x98] sm:$0xff]
          %v286 = vld [vmem:[%s219 + $0xa0] sm:$0xff]
          %v287 = vld [vmem:[%s219 + $0xa8] sm:$0xff]
          %v288 = vld [vmem:[%s219 + $0xb0] sm:$0xff]
          %v289 = vld [vmem:[%s225] sm:$0xff]
          %v290 = vld [vmem:[%s225 + $0x8] sm:$0xff]
          %v291 = vld [vmem:[%s225 + $0x10] sm:$0xff]
          %v292 = vld [vmem:[%s225 + $0x18] sm:$0xff]
          %v293 = vld [vmem:[%s225 + $0x20] sm:$0xff]
          %v294 = vld [vmem:[%s225 + $0x28] sm:$0xff]
          %vm295 = vcmask 64512
          %v297 = vsel %vm295, %v243, 0
          %v300 = vsel %vm295, %v244, 0
          %v303 = vsel %vm295, %v245, 0
          %v306 = vsel %vm295, %v246, 0
          %v309 = vsel %vm295, %v247, 0
          %v312 = vsel %vm295, %v248, 0
          %v315 = vsel %vm295, %v249, 0
          %v318 = vsel %vm295, %v250, 0
          %v321 = vsel %vm295, %v251, 0
          %v324 = vsel %vm295, %v252, 0
          %v327 = vsel %vm295, %v253, 0
          %v330 = vsel %vm295, %v254, 0
          %v333 = vsel %vm295, %v255, 0
          %v336 = vsel %vm295, %v256, 0
          %v339 = vsel %vm295, %v257, 0
          %v342 = vsel %vm295, %v258, 0
          %v345 = vsel %vm295, %v259, 0
          %v348 = vsel %vm295, %v260, 0
          %v351 = vsel %vm295, %v261, 0
          %v354 = vsel %vm295, %v262, 0
          %v357 = vsel %vm295, %v263, 0
          %v360 = vsel %vm295, %v264, 0
          %v363 = vsel %vm295, %v265, 0
          %365 = vmatpush.msra.mxu0 0.0
          %366 = vmatpush.msra.mxu0 0.0
          %367 = vmatpush.msra.mxu0 0.0
          %368 = vmatpush.msra.mxu0 0.0
          %369 = vmatpush.msra.mxu0 0.0
          %370 = vmatpush.msra.mxu0 0.0
          %371 = vmatpush.msra.mxu0 0.0
          %372 = vmatpush.msra.mxu0 0.0
          %373 = vmatpush.msra.mxu0 0.0
          %374 = vmatpush.msra.mxu0 0.0
          %375 = vmatpush.msra.mxu0 0.0
          %376 = vmatpush.msra.mxu0 0.0
          %377 = vmatpush.msra.mxu0 0.0
          %378 = vmatpush.msra.mxu0 0.0
          %379 = vmatpush.msra.mxu0 0.0
          %380 = vmatpush.msra.mxu0 %v289
          %381 = vmatmul.f32.gmra.mxu0 %v297
          %v382 = vpop.f32.mrf.mxu0
          %v383 = vadd.f32 0.0, %v382
          %384 = vmatmul.f32.gmra.mxu0 %v300
          %v385 = vpop.f32.mrf.mxu0
          %v386 = vadd.f32 0.0, %v385
          %387 = vmatmul.f32.gmra.mxu0 %v303
          %v388 = vpop.f32.mrf.mxu0
          %v389 = vadd.f32 0.0, %v388
          %390 = vmatmul.f32.gmra.mxu0 %v306
          %v391 = vpop.f32.mrf.mxu0
          %v392 = vadd.f32 0.0, %v391
          %393 = vmatmul.f32.gmra.mxu0 %v309
          %v394 = vpop.f32.mrf.mxu0
          %v395 = vadd.f32 0.0, %v394
          %396 = vmatmul.f32.gmra.mxu0 %v312
          %v397 = vpop.f32.mrf.mxu0
          %v398 = vadd.f32 0.0, %v397
          %399 = vmatmul.f32.gmra.mxu0 %v315
          %v400 = vpop.f32.mrf.mxu0
          %v401 = vadd.f32 0.0, %v400
          %402 = vmatmul.f32.gmra.mxu0 %v318
          %v403 = vpop.f32.mrf.mxu0
          %v404 = vadd.f32 0.0, %v403
          %405 = vmatmul.f32.gmra.mxu0 %v321
          %v406 = vpop.f32.mrf.mxu0
          %v407 = vadd.f32 0.0, %v406
          %408 = vmatmul.f32.gmra.mxu0 %v324
          %v409 = vpop.f32.mrf.mxu0
          %v410 = vadd.f32 0.0, %v409
          %411 = vmatmul.f32.gmra.mxu0 %v327
          %v412 = vpop.f32.mrf.mxu0
          %v413 = vadd.f32 0.0, %v412
          %414 = vmatmul.f32.gmra.mxu0 %v330
          %v415 = vpop.f32.mrf.mxu0
          %v416 = vadd.f32 0.0, %v415
          %417 = vmatmul.f32.gmra.mxu0 %v333
          %v418 = vpop.f32.mrf.mxu0
          %v419 = vadd.f32 0.0, %v418
          %420 = vmatmul.f32.gmra.mxu0 %v336
          %v421 = vpop.f32.mrf.mxu0
          %v422 = vadd.f32 0.0, %v421
          %423 = vmatmul.f32.gmra.mxu0 %v339
          %v424 = vpop.f32.mrf.mxu0
          %v425 = vadd.f32 0.0, %v424
          %426 = vmatmul.f32.gmra.mxu0 %v342
          %v427 = vpop.f32.mrf.mxu0
          %v428 = vadd.f32 0.0, %v427
          %429 = vmatmul.f32.gmra.mxu0 %v345
          %v430 = vpop.f32.mrf.mxu0
          %v431 = vadd.f32 0.0, %v430
          %432 = vmatmul.f32.gmra.mxu0 %v348
          %v433 = vpop.f32.mrf.mxu0
          %v434 = vadd.f32 0.0, %v433
          %435 = vmatmul.f32.gmra.mxu0 %v351
          %v436 = vpop.f32.mrf.mxu0
          %v437 = vadd.f32 0.0, %v436
          %438 = vmatmul.f32.gmra.mxu0 %v354
          %v439 = vpop.f32.mrf.mxu0
          %v440 = vadd.f32 0.0, %v439
          %441 = vmatmul.f32.gmra.mxu0 %v357
          %v442 = vpop.f32.mrf.mxu0
          %v443 = vadd.f32 0.0, %v442
          %444 = vmatmul.f32.gmra.mxu0 %v360
          %v445 = vpop.f32.mrf.mxu0
          %v446 = vadd.f32 0.0, %v445
          %447 = vmatmul.f32.gmra.mxu0 %v363
          %v448 = vpop.f32.mrf.mxu0
          %v449 = vadd.f32 0.0, %v448
          %450 = vdwg.mxu0
          %451 = vmatpush.msra.mxu0 0.0
          %452 = vmatpush.msra.mxu0 0.0
          %453 = vmatpush.msra.mxu0 0.0
          %454 = vmatpush.msra.mxu0 0.0
          %455 = vmatpush.msra.mxu0 0.0
          %456 = vmatpush.msra.mxu0 0.0
          %457 = vmatpush.msra.mxu0 0.0
          %458 = vmatpush.msra.mxu0 0.0
          %459 = vmatpush.msra.mxu0 0.0
          %460 = vmatpush.msra.mxu0 0.0
          %461 = vmatpush.msra.mxu0 0.0
          %462 = vmatpush.msra.mxu0 0.0
          %463 = vmatpush.msra.mxu0 0.0
          %464 = vmatpush.msra.mxu0 0.0
          %465 = vmatpush.msra.mxu0 0.0
          %466 = vmatpush.msra.mxu0 %v290
          %467 = vmatmul.f32.gmra.mxu0 %v297
          %v468 = vpop.f32.mrf.mxu0
          %v469 = vadd.f32 0.0, %v468
          %470 = vmatmul.f32.gmra.mxu0 %v300
          %v471 = vpop.f32.mrf.mxu0
          %v472 = vadd.f32 0.0, %v471
          %473 = vmatmul.f32.gmra.mxu0 %v303
          %v474 = vpop.f32.mrf.mxu0
          %v475 = vadd.f32 0.0, %v474
          %476 = vmatmul.f32.gmra.mxu0 %v306
          %v477 = vpop.f32.mrf.mxu0
          %v478 = vadd.f32 0.0, %v477
          %479 = vmatmul.f32.gmra.mxu0 %v309
          %v480 = vpop.f32.mrf.mxu0
          %v481 = vadd.f32 0.0, %v480
          %482 = vmatmul.f32.gmra.mxu0 %v312
          %v483 = vpop.f32.mrf.mxu0
          %v484 = vadd.f32 0.0, %v483
          %485 = vmatmul.f32.gmra.mxu0 %v315
          %v486 = vpop.f32.mrf.mxu0
          %v487 = vadd.f32 0.0, %v486
          %488 = vmatmul.f32.gmra.mxu0 %v318
          %v489 = vpop.f32.mrf.mxu0
          %v490 = vadd.f32 0.0, %v489
          %491 = vmatmul.f32.gmra.mxu0 %v321
          %v492 = vpop.f32.mrf.mxu0
          %v493 = vadd.f32 0.0, %v492
          %494 = vmatmul.f32.gmra.mxu0 %v324
          %v495 = vpop.f32.mrf.mxu0
          %v496 = vadd.f32 0.0, %v495
          %497 = vmatmul.f32.gmra.mxu0 %v327
          %v498 = vpop.f32.mrf.mxu0
          %v499 = vadd.f32 0.0, %v498
          %500 = vmatmul.f32.gmra.mxu0 %v330
          %v501 = vpop.f32.mrf.mxu0
          %v502 = vadd.f32 0.0, %v501
          %503 = vmatmul.f32.gmra.mxu0 %v333
          %v504 = vpop.f32.mrf.mxu0
          %v505 = vadd.f32 0.0, %v504
          %506 = vmatmul.f32.gmra.mxu0 %v336
          %v507 = vpop.f32.mrf.mxu0
          %v508 = vadd.f32 0.0, %v507
          %509 = vmatmul.f32.gmra.mxu0 %v339
          %v510 = vpop.f32.mrf.mxu0
          %v511 = vadd.f32 0.0, %v510
          %512 = vmatmul.f32.gmra.mxu0 %v342
          %v513 = vpop.f32.mrf.mxu0
          %v514 = vadd.f32 0.0, %v513
          %515 = vmatmul.f32.gmra.mxu0 %v345
          %v516 = vpop.f32.mrf.mxu0
          %v517 = vadd.f32 0.0, %v516
          %518 = vmatmul.f32.gmra.mxu0 %v348
          %v519 = vpop.f32.mrf.mxu0
          %v520 = vadd.f32 0.0, %v519
          %521 = vmatmul.f32.gmra.mxu0 %v351
          %v522 = vpop.f32.mrf.mxu0
          %v523 = vadd.f32 0.0, %v522
          %524 = vmatmul.f32.gmra.mxu0 %v354
          %v525 = vpop.f32.mrf.mxu0
          %v526 = vadd.f32 0.0, %v525
          %527 = vmatmul.f32.gmra.mxu0 %v357
          %v528 = vpop.f32.mrf.mxu0
          %v529 = vadd.f32 0.0, %v528
          %530 = vmatmul.f32.gmra.mxu0 %v360
          %v531 = vpop.f32.mrf.mxu0
          %v532 = vadd.f32 0.0, %v531
          %533 = vmatmul.f32.gmra.mxu0 %v363
          %v534 = vpop.f32.mrf.mxu0
          %v535 = vadd.f32 0.0, %v534
          %536 = vdwg.mxu0
          %537 = vmatpush.msra.mxu0 0.0
          %538 = vmatpush.msra.mxu0 0.0
          %539 = vmatpush.msra.mxu0 0.0
          %540 = vmatpush.msra.mxu0 0.0
          %541 = vmatpush.msra.mxu0 0.0
          %542 = vmatpush.msra.mxu0 0.0
          %543 = vmatpush.msra.mxu0 0.0
          %544 = vmatpush.msra.mxu0 0.0
          %545 = vmatpush.msra.mxu0 0.0
          %546 = vmatpush.msra.mxu0 0.0
          %547 = vmatpush.msra.mxu0 0.0
          %548 = vmatpush.msra.mxu0 0.0
          %549 = vmatpush.msra.mxu0 0.0
          %550 = vmatpush.msra.mxu0 0.0
          %551 = vmatpush.msra.mxu0 0.0
          %552 = vmatpush.msra.mxu0 %v291
          %553 = vmatmul.f32.gmra.mxu0 %v297
          %v554 = vpop.f32.mrf.mxu0
          %v555 = vadd.f32 0.0, %v554
          %556 = vmatmul.f32.gmra.mxu0 %v300
          %v557 = vpop.f32.mrf.mxu0
          %v558 = vadd.f32 0.0, %v557
          %559 = vmatmul.f32.gmra.mxu0 %v303
          %v560 = vpop.f32.mrf.mxu0
          %v561 = vadd.f32 0.0, %v560
          %562 = vmatmul.f32.gmra.mxu0 %v306
          %v563 = vpop.f32.mrf.mxu0
          %v564 = vadd.f32 0.0, %v563
          %565 = vmatmul.f32.gmra.mxu0 %v309
          %v566 = vpop.f32.mrf.mxu0
          %v567 = vadd.f32 0.0, %v566
          %568 = vmatmul.f32.gmra.mxu0 %v312
          %v569 = vpop.f32.mrf.mxu0
          %v570 = vadd.f32 0.0, %v569
          %571 = vmatmul.f32.gmra.mxu0 %v315
          %v572 = vpop.f32.mrf.mxu0
          %v573 = vadd.f32 0.0, %v572
          %574 = vmatmul.f32.gmra.mxu0 %v318
          %v575 = vpop.f32.mrf.mxu0
          %v576 = vadd.f32 0.0, %v575
          %577 = vmatmul.f32.gmra.mxu0 %v321
          %v578 = vpop.f32.mrf.mxu0
          %v579 = vadd.f32 0.0, %v578
          %580 = vmatmul.f32.gmra.mxu0 %v324
          %v581 = vpop.f32.mrf.mxu0
          %v582 = vadd.f32 0.0, %v581
          %583 = vmatmul.f32.gmra.mxu0 %v327
          %v584 = vpop.f32.mrf.mxu0
          %v585 = vadd.f32 0.0, %v584
          %586 = vmatmul.f32.gmra.mxu0 %v330
          %v587 = vpop.f32.mrf.mxu0
          %v588 = vadd.f32 0.0, %v587
          %589 = vmatmul.f32.gmra.mxu0 %v333
          %v590 = vpop.f32.mrf.mxu0
          %v591 = vadd.f32 0.0, %v590
          %592 = vmatmul.f32.gmra.mxu0 %v336
          %v593 = vpop.f32.mrf.mxu0
          %v594 = vadd.f32 0.0, %v593
          %595 = vmatmul.f32.gmra.mxu0 %v339
          %v596 = vpop.f32.mrf.mxu0
          %v597 = vadd.f32 0.0, %v596
          %598 = vmatmul.f32.gmra.mxu0 %v342
          %v599 = vpop.f32.mrf.mxu0
          %v600 = vadd.f32 0.0, %v599
          %601 = vmatmul.f32.gmra.mxu0 %v345
          %v602 = vpop.f32.mrf.mxu0
          %v603 = vadd.f32 0.0, %v602
          %604 = vmatmul.f32.gmra.mxu0 %v348
          %v605 = vpop.f32.mrf.mxu0
          %v606 = vadd.f32 0.0, %v605
          %607 = vmatmul.f32.gmra.mxu0 %v351
          %v608 = vpop.f32.mrf.mxu0
          %v609 = vadd.f32 0.0, %v608
          %610 = vmatmul.f32.gmra.mxu0 %v354
          %v611 = vpop.f32.mrf.mxu0
          %v612 = vadd.f32 0.0, %v611
          %613 = vmatmul.f32.gmra.mxu0 %v357
          %v614 = vpop.f32.mrf.mxu0
          %v615 = vadd.f32 0.0, %v614
          %616 = vmatmul.f32.gmra.mxu0 %v360
          %v617 = vpop.f32.mrf.mxu0
          %v618 = vadd.f32 0.0, %v617
          %619 = vmatmul.f32.gmra.mxu0 %v363
          %v620 = vpop.f32.mrf.mxu0
          %v621 = vadd.f32 0.0, %v620
          %622 = vdwg.mxu0
          %v623 = vmax.f32 %v383, 0.0
          %v624 = vmax.f32 %v469, 0.0
          %v625 = vmax.f32 %v555, 0.0
          %v626 = vmax.f32 %v386, 0.0
          %v627 = vmax.f32 %v472, 0.0
          %v628 = vmax.f32 %v558, 0.0
          %v629 = vmax.f32 %v389, 0.0
          %v630 = vmax.f32 %v475, 0.0
          %v631 = vmax.f32 %v561, 0.0
          %v632 = vmax.f32 %v392, 0.0
          %v633 = vmax.f32 %v478, 0.0
          %v634 = vmax.f32 %v564, 0.0
          %v635 = vmax.f32 %v395, 0.0
          %v636 = vmax.f32 %v481, 0.0
          %v637 = vmax.f32 %v567, 0.0
          %v638 = vmax.f32 %v398, 0.0
          %v639 = vmax.f32 %v484, 0.0
          %v640 = vmax.f32 %v570, 0.0
          %v641 = vmax.f32 %v401, 0.0
          %v642 = vmax.f32 %v487, 0.0
          %v643 = vmax.f32 %v573, 0.0
          %v644 = vmax.f32 %v404, 0.0
          %v645 = vmax.f32 %v490, 0.0
          %v646 = vmax.f32 %v576, 0.0
          %v647 = vmax.f32 %v407, 0.0
          %v648 = vmax.f32 %v493, 0.0
          %v649 = vmax.f32 %v579, 0.0
          %v650 = vmax.f32 %v410, 0.0
          %v651 = vmax.f32 %v496, 0.0
          %v652 = vmax.f32 %v582, 0.0
          %v653 = vmax.f32 %v413, 0.0
          %v654 = vmax.f32 %v499, 0.0
          %v655 = vmax.f32 %v585, 0.0
          %v656 = vmax.f32 %v416, 0.0
          %v657 = vmax.f32 %v502, 0.0
          %v658 = vmax.f32 %v588, 0.0
          %v659 = vmax.f32 %v419, 0.0
          %v660 = vmax.f32 %v505, 0.0
          %v661 = vmax.f32 %v591, 0.0
          %v662 = vmax.f32 %v422, 0.0
          %v663 = vmax.f32 %v508, 0.0
          %v664 = vmax.f32 %v594, 0.0
          %v665 = vmax.f32 %v425, 0.0
          %v666 = vmax.f32 %v511, 0.0
          %v667 = vmax.f32 %v597, 0.0
          %v668 = vmax.f32 %v428, 0.0
          %v669 = vmax.f32 %v514, 0.0
          %v670 = vmax.f32 %v600, 0.0
          %v671 = vmax.f32 %v431, 0.0
          %v672 = vmax.f32 %v517, 0.0
          %v673 = vmax.f32 %v603, 0.0
          %v674 = vmax.f32 %v434, 0.0
          %v675 = vmax.f32 %v520, 0.0
          %v676 = vmax.f32 %v606, 0.0
          %v677 = vmax.f32 %v437, 0.0
          %v678 = vmax.f32 %v523, 0.0
          %v679 = vmax.f32 %v609, 0.0
          %v680 = vmax.f32 %v440, 0.0
          %v681 = vmax.f32 %v526, 0.0
          %v682 = vmax.f32 %v612, 0.0
          %v683 = vmax.f32 %v443, 0.0
          %v684 = vmax.f32 %v529, 0.0
          %v685 = vmax.f32 %v615, 0.0
          %v686 = vmax.f32 %v446, 0.0
          %v687 = vmax.f32 %v532, 0.0
          %v688 = vmax.f32 %v618, 0.0
          %v689 = vmax.f32 %v449, 0.0
          %v690 = vmax.f32 %v535, 0.0
          %v691 = vmax.f32 %v621, 0.0
          %v693 = vsel %vm295, %v266, 0
          %v696 = vsel %vm295, %v267, 0
          %v699 = vsel %vm295, %v268, 0
          %v702 = vsel %vm295, %v269, 0
          %v705 = vsel %vm295, %v270, 0
          %v708 = vsel %vm295, %v271, 0
          %v711 = vsel %vm295, %v272, 0
          %v714 = vsel %vm295, %v273, 0
          %v717 = vsel %vm295, %v274, 0
          %v720 = vsel %vm295, %v275, 0
          %v723 = vsel %vm295, %v276, 0
          %v726 = vsel %vm295, %v277, 0
          %v729 = vsel %vm295, %v278, 0
          %v732 = vsel %vm295, %v279, 0
          %v735 = vsel %vm295, %v280, 0
          %v738 = vsel %vm295, %v281, 0
          %v741 = vsel %vm295, %v282, 0
          %v744 = vsel %vm295, %v283, 0
          %v747 = vsel %vm295, %v284, 0
          %v750 = vsel %vm295, %v285, 0
          %v753 = vsel %vm295, %v286, 0
          %v756 = vsel %vm295, %v287, 0
          %v759 = vsel %vm295, %v288, 0
          %761 = vmatpush.msra.mxu0 0.0
          %762 = vmatpush.msra.mxu0 0.0
          %763 = vmatpush.msra.mxu0 0.0
          %764 = vmatpush.msra.mxu0 0.0
          %765 = vmatpush.msra.mxu0 0.0
          %766 = vmatpush.msra.mxu0 0.0
          %767 = vmatpush.msra.mxu0 0.0
          %768 = vmatpush.msra.mxu0 0.0
          %769 = vmatpush.msra.mxu0 0.0
          %770 = vmatpush.msra.mxu0 0.0
          %771 = vmatpush.msra.mxu0 0.0
          %772 = vmatpush.msra.mxu0 0.0
          %773 = vmatpush.msra.mxu0 0.0
          %774 = vmatpush.msra.mxu0 0.0
          %775 = vmatpush.msra.mxu0 0.0
          %776 = vmatpush.msra.mxu0 %v292
          %777 = vmatmul.f32.gmra.mxu0 %v693
          %v778 = vpop.f32.mrf.mxu0
          %v779 = vadd.f32 0.0, %v778
          %780 = vmatmul.f32.gmra.mxu0 %v696
          %v781 = vpop.f32.mrf.mxu0
          %v782 = vadd.f32 0.0, %v781
          %783 = vmatmul.f32.gmra.mxu0 %v699
          %v784 = vpop.f32.mrf.mxu0
          %v785 = vadd.f32 0.0, %v784
          %786 = vmatmul.f32.gmra.mxu0 %v702
          %v787 = vpop.f32.mrf.mxu0
          %v788 = vadd.f32 0.0, %v787
          %789 = vmatmul.f32.gmra.mxu0 %v705
          %v790 = vpop.f32.mrf.mxu0
          %v791 = vadd.f32 0.0, %v790
          %792 = vmatmul.f32.gmra.mxu0 %v708
          %v793 = vpop.f32.mrf.mxu0
          %v794 = vadd.f32 0.0, %v793
          %795 = vmatmul.f32.gmra.mxu0 %v711
          %v796 = vpop.f32.mrf.mxu0
          %v797 = vadd.f32 0.0, %v796
          %798 = vmatmul.f32.gmra.mxu0 %v714
          %v799 = vpop.f32.mrf.mxu0
          %v800 = vadd.f32 0.0, %v799
          %801 = vmatmul.f32.gmra.mxu0 %v717
          %v802 = vpop.f32.mrf.mxu0
          %v803 = vadd.f32 0.0, %v802
          %804 = vmatmul.f32.gmra.mxu0 %v720
          %v805 = vpop.f32.mrf.mxu0
          %v806 = vadd.f32 0.0, %v805
          %807 = vmatmul.f32.gmra.mxu0 %v723
          %v808 = vpop.f32.mrf.mxu0
          %v809 = vadd.f32 0.0, %v808
          %810 = vmatmul.f32.gmra.mxu0 %v726
          %v811 = vpop.f32.mrf.mxu0
          %v812 = vadd.f32 0.0, %v811
          %813 = vmatmul.f32.gmra.mxu0 %v729
          %v814 = vpop.f32.mrf.mxu0
          %v815 = vadd.f32 0.0, %v814
          %816 = vmatmul.f32.gmra.mxu0 %v732
          %v817 = vpop.f32.mrf.mxu0
          %v818 = vadd.f32 0.0, %v817
          %819 = vmatmul.f32.gmra.mxu0 %v735
          %v820 = vpop.f32.mrf.mxu0
          %v821 = vadd.f32 0.0, %v820
          %822 = vmatmul.f32.gmra.mxu0 %v738
          %v823 = vpop.f32.mrf.mxu0
          %v824 = vadd.f32 0.0, %v823
          %825 = vmatmul.f32.gmra.mxu0 %v741
          %v826 = vpop.f32.mrf.mxu0
          %v827 = vadd.f32 0.0, %v826
          %828 = vmatmul.f32.gmra.mxu0 %v744
          %v829 = vpop.f32.mrf.mxu0
          %v830 = vadd.f32 0.0, %v829
          %831 = vmatmul.f32.gmra.mxu0 %v747
          %v832 = vpop.f32.mrf.mxu0
          %v833 = vadd.f32 0.0, %v832
          %834 = vmatmul.f32.gmra.mxu0 %v750
          %v835 = vpop.f32.mrf.mxu0
          %v836 = vadd.f32 0.0, %v835
          %837 = vmatmul.f32.gmra.mxu0 %v753
          %v838 = vpop.f32.mrf.mxu0
          %v839 = vadd.f32 0.0, %v838
          %840 = vmatmul.f32.gmra.mxu0 %v756
          %v841 = vpop.f32.mrf.mxu0
          %v842 = vadd.f32 0.0, %v841
          %843 = vmatmul.f32.gmra.mxu0 %v759
          %v844 = vpop.f32.mrf.mxu0
          %v845 = vadd.f32 0.0, %v844
          %846 = vdwg.mxu0
          %847 = vmatpush.msra.mxu0 0.0
          %848 = vmatpush.msra.mxu0 0.0
          %849 = vmatpush.msra.mxu0 0.0
          %850 = vmatpush.msra.mxu0 0.0
          %851 = vmatpush.msra.mxu0 0.0
          %852 = vmatpush.msra.mxu0 0.0
          %853 = vmatpush.msra.mxu0 0.0
          %854 = vmatpush.msra.mxu0 0.0
          %855 = vmatpush.msra.mxu0 0.0
          %856 = vmatpush.msra.mxu0 0.0
          %857 = vmatpush.msra.mxu0 0.0
          %858 = vmatpush.msra.mxu0 0.0
          %859 = vmatpush.msra.mxu0 0.0
          %860 = vmatpush.msra.mxu0 0.0
          %861 = vmatpush.msra.mxu0 0.0
          %862 = vmatpush.msra.mxu0 %v293
          %863 = vmatmul.f32.gmra.mxu0 %v693
          %v864 = vpop.f32.mrf.mxu0
          %v865 = vadd.f32 0.0, %v864
          %866 = vmatmul.f32.gmra.mxu0 %v696
          %v867 = vpop.f32.mrf.mxu0
          %v868 = vadd.f32 0.0, %v867
          %869 = vmatmul.f32.gmra.mxu0 %v699
          %v870 = vpop.f32.mrf.mxu0
          %v871 = vadd.f32 0.0, %v870
          %872 = vmatmul.f32.gmra.mxu0 %v702
          %v873 = vpop.f32.mrf.mxu0
          %v874 = vadd.f32 0.0, %v873
          %875 = vmatmul.f32.gmra.mxu0 %v705
          %v876 = vpop.f32.mrf.mxu0
          %v877 = vadd.f32 0.0, %v876
          %878 = vmatmul.f32.gmra.mxu0 %v708
          %v879 = vpop.f32.mrf.mxu0
          %v880 = vadd.f32 0.0, %v879
          %881 = vmatmul.f32.gmra.mxu0 %v711
          %v882 = vpop.f32.mrf.mxu0
          %v883 = vadd.f32 0.0, %v882
          %884 = vmatmul.f32.gmra.mxu0 %v714
          %v885 = vpop.f32.mrf.mxu0
          %v886 = vadd.f32 0.0, %v885
          %887 = vmatmul.f32.gmra.mxu0 %v717
          %v888 = vpop.f32.mrf.mxu0
          %v889 = vadd.f32 0.0, %v888
          %890 = vmatmul.f32.gmra.mxu0 %v720
          %v891 = vpop.f32.mrf.mxu0
          %v892 = vadd.f32 0.0, %v891
          %893 = vmatmul.f32.gmra.mxu0 %v723
          %v894 = vpop.f32.mrf.mxu0
          %v895 = vadd.f32 0.0, %v894
          %896 = vmatmul.f32.gmra.mxu0 %v726
          %v897 = vpop.f32.mrf.mxu0
          %v898 = vadd.f32 0.0, %v897
          %899 = vmatmul.f32.gmra.mxu0 %v729
          %v900 = vpop.f32.mrf.mxu0
          %v901 = vadd.f32 0.0, %v900
          %902 = vmatmul.f32.gmra.mxu0 %v732
          %v903 = vpop.f32.mrf.mxu0
          %v904 = vadd.f32 0.0, %v903
          %905 = vmatmul.f32.gmra.mxu0 %v735
          %v906 = vpop.f32.mrf.mxu0
          %v907 = vadd.f32 0.0, %v906
          %908 = vmatmul.f32.gmra.mxu0 %v738
          %v909 = vpop.f32.mrf.mxu0
          %v910 = vadd.f32 0.0, %v909
          %911 = vmatmul.f32.gmra.mxu0 %v741
          %v912 = vpop.f32.mrf.mxu0
          %v913 = vadd.f32 0.0, %v912
          %914 = vmatmul.f32.gmra.mxu0 %v744
          %v915 = vpop.f32.mrf.mxu0
          %v916 = vadd.f32 0.0, %v915
          %917 = vmatmul.f32.gmra.mxu0 %v747
          %v918 = vpop.f32.mrf.mxu0
          %v919 = vadd.f32 0.0, %v918
          %920 = vmatmul.f32.gmra.mxu0 %v750
          %v921 = vpop.f32.mrf.mxu0
          %v922 = vadd.f32 0.0, %v921
          %923 = vmatmul.f32.gmra.mxu0 %v753
          %v924 = vpop.f32.mrf.mxu0
          %v925 = vadd.f32 0.0, %v924
          %926 = vmatmul.f32.gmra.mxu0 %v756
          %v927 = vpop.f32.mrf.mxu0
          %v928 = vadd.f32 0.0, %v927
          %929 = vmatmul.f32.gmra.mxu0 %v759
          %v930 = vpop.f32.mrf.mxu0
          %v931 = vadd.f32 0.0, %v930
          %932 = vdwg.mxu0
          %933 = vmatpush.msra.mxu0 0.0
          %934 = vmatpush.msra.mxu0 0.0
          %935 = vmatpush.msra.mxu0 0.0
          %936 = vmatpush.msra.mxu0 0.0
          %937 = vmatpush.msra.mxu0 0.0
          %938 = vmatpush.msra.mxu0 0.0
          %939 = vmatpush.msra.mxu0 0.0
          %940 = vmatpush.msra.mxu0 0.0
          %941 = vmatpush.msra.mxu0 0.0
          %942 = vmatpush.msra.mxu0 0.0
          %943 = vmatpush.msra.mxu0 0.0
          %944 = vmatpush.msra.mxu0 0.0
          %945 = vmatpush.msra.mxu0 0.0
          %946 = vmatpush.msra.mxu0 0.0
          %947 = vmatpush.msra.mxu0 0.0
          %948 = vmatpush.msra.mxu0 %v294
          %949 = vmatmul.f32.gmra.mxu0 %v693
          %v950 = vpop.f32.mrf.mxu0
          %v951 = vadd.f32 0.0, %v950
          %952 = vmatmul.f32.gmra.mxu0 %v696
          %v953 = vpop.f32.mrf.mxu0
          %v954 = vadd.f32 0.0, %v953
          %955 = vmatmul.f32.gmra.mxu0 %v699
          %v956 = vpop.f32.mrf.mxu0
          %v957 = vadd.f32 0.0, %v956
          %958 = vmatmul.f32.gmra.mxu0 %v702
          %v959 = vpop.f32.mrf.mxu0
          %v960 = vadd.f32 0.0, %v959
          %961 = vmatmul.f32.gmra.mxu0 %v705
          %v962 = vpop.f32.mrf.mxu0
          %v963 = vadd.f32 0.0, %v962
          %964 = vmatmul.f32.gmra.mxu0 %v708
          %v965 = vpop.f32.mrf.mxu0
          %v966 = vadd.f32 0.0, %v965
          %967 = vmatmul.f32.gmra.mxu0 %v711
          %v968 = vpop.f32.mrf.mxu0
          %v969 = vadd.f32 0.0, %v968
          %970 = vmatmul.f32.gmra.mxu0 %v714
          %v971 = vpop.f32.mrf.mxu0
          %v972 = vadd.f32 0.0, %v971
          %973 = vmatmul.f32.gmra.mxu0 %v717
          %v974 = vpop.f32.mrf.mxu0
          %v975 = vadd.f32 0.0, %v974
          %976 = vmatmul.f32.gmra.mxu0 %v720
          %v977 = vpop.f32.mrf.mxu0
          %v978 = vadd.f32 0.0, %v977
          %979 = vmatmul.f32.gmra.mxu0 %v723
          %v980 = vpop.f32.mrf.mxu0
          %v981 = vadd.f32 0.0, %v980
          %982 = vmatmul.f32.gmra.mxu0 %v726
          %v983 = vpop.f32.mrf.mxu0
          %v984 = vadd.f32 0.0, %v983
          %985 = vmatmul.f32.gmra.mxu0 %v729
          %v986 = vpop.f32.mrf.mxu0
          %v987 = vadd.f32 0.0, %v986
          %988 = vmatmul.f32.gmra.mxu0 %v732
          %v989 = vpop.f32.mrf.mxu0
          %v990 = vadd.f32 0.0, %v989
          %991 = vmatmul.f32.gmra.mxu0 %v735
          %v992 = vpop.f32.mrf.mxu0
          %v993 = vadd.f32 0.0, %v992
          %994 = vmatmul.f32.gmra.mxu0 %v738
          %v995 = vpop.f32.mrf.mxu0
          %v996 = vadd.f32 0.0, %v995
          %997 = vmatmul.f32.gmra.mxu0 %v741
          %v998 = vpop.f32.mrf.mxu0
          %v999 = vadd.f32 0.0, %v998
          %1000 = vmatmul.f32.gmra.mxu0 %v744
          %v1001 = vpop.f32.mrf.mxu0
          %v1002 = vadd.f32 0.0, %v1001
          %1003 = vmatmul.f32.gmra.mxu0 %v747
          %v1004 = vpop.f32.mrf.mxu0
          %v1005 = vadd.f32 0.0, %v1004
          %1006 = vmatmul.f32.gmra.mxu0 %v750
          %v1007 = vpop.f32.mrf.mxu0
          %v1008 = vadd.f32 0.0, %v1007
          %1009 = vmatmul.f32.gmra.mxu0 %v753
          %v1010 = vpop.f32.mrf.mxu0
          %v1011 = vadd.f32 0.0, %v1010
          %1012 = vmatmul.f32.gmra.mxu0 %v756
          %v1013 = vpop.f32.mrf.mxu0
          %v1014 = vadd.f32 0.0, %v1013
          %1015 = vmatmul.f32.gmra.mxu0 %v759
          %v1016 = vpop.f32.mrf.mxu0
          %v1017 = vadd.f32 0.0, %v1016
          %1018 = vdwg.mxu0
          %v1019 = vmul.f32 %v623, 4.0
          %v1020 = vmul.f32 %v624, 4.0
          %v1021 = vmul.f32 %v625, 4.0
          %v1022 = vmul.f32 %v626, 4.0
          %v1023 = vmul.f32 %v627, 4.0
          %v1024 = vmul.f32 %v628, 4.0
          %v1025 = vmul.f32 %v629, 4.0
          %v1026 = vmul.f32 %v630, 4.0
          %v1027 = vmul.f32 %v631, 4.0
          %v1028 = vmul.f32 %v632, 4.0
          %v1029 = vmul.f32 %v633, 4.0
          %v1030 = vmul.f32 %v634, 4.0
          %v1031 = vmul.f32 %v635, 4.0
          %v1032 = vmul.f32 %v636, 4.0
          %v1033 = vmul.f32 %v637, 4.0
          %v1034 = vmul.f32 %v638, 4.0
          %v1035 = vmul.f32 %v639, 4.0
          %v1036 = vmul.f32 %v640, 4.0
          %v1037 = vmul.f32 %v641, 4.0
          %v1038 = vmul.f32 %v642, 4.0
          %v1039 = vmul.f32 %v643, 4.0
          %v1040 = vmul.f32 %v644, 4.0
          %v1041 = vmul.f32 %v645, 4.0
          %v1042 = vmul.f32 %v646, 4.0
          %v1043 = vmul.f32 %v647, 4.0
          %v1044 = vmul.f32 %v648, 4.0
          %v1045 = vmul.f32 %v649, 4.0
          %v1046 = vmul.f32 %v650, 4.0
          %v1047 = vmul.f32 %v651, 4.0
          %v1048 = vmul.f32 %v652, 4.0
          %v1049 = vmul.f32 %v653, 4.0
          %v1050 = vmul.f32 %v654, 4.0
          %v1051 = vmul.f32 %v655, 4.0
          %v1052 = vmul.f32 %v656, 4.0
          %v1053 = vmul.f32 %v657, 4.0
          %v1054 = vmul.f32 %v658, 4.0
          %v1055 = vmul.f32 %v659, 4.0
          %v1056 = vmul.f32 %v660, 4.0
          %v1057 = vmul.f32 %v661, 4.0
          %v1058 = vmul.f32 %v662, 4.0
          %v1059 = vmul.f32 %v663, 4.0
          %v1060 = vmul.f32 %v664, 4.0
          %v1061 = vmul.f32 %v665, 4.0
          %v1062 = vmul.f32 %v666, 4.0
          %v1063 = vmul.f32 %v667, 4.0
          %v1064 = vmul.f32 %v668, 4.0
          %v1065 = vmul.f32 %v669, 4.0
          %v1066 = vmul.f32 %v670, 4.0
          %v1067 = vmul.f32 %v671, 4.0
          %v1068 = vmul.f32 %v672, 4.0
          %v1069 = vmul.f32 %v673, 4.0
          %v1070 = vmul.f32 %v674, 4.0
          %v1071 = vmul.f32 %v675, 4.0
          %v1072 = vmul.f32 %v676, 4.0
          %v1073 = vmul.f32 %v677, 4.0
          %v1074 = vmul.f32 %v678, 4.0
          %v1075 = vmul.f32 %v679, 4.0
          %v1076 = vmul.f32 %v680, 4.0
          %v1077 = vmul.f32 %v681, 4.0
          %v1078 = vmul.f32 %v682, 4.0
          %v1079 = vmul.f32 %v683, 4.0
          %v1080 = vmul.f32 %v684, 4.0
          %v1081 = vmul.f32 %v685, 4.0
          %v1082 = vmul.f32 %v686, 4.0
          %v1083 = vmul.f32 %v687, 4.0
          %v1084 = vmul.f32 %v688, 4.0
          %v1085 = vmul.f32 %v689, 4.0
          %v1086 = vmul.f32 %v690, 4.0
          %v1087 = vmul.f32 %v691, 4.0
          %v1088 = vadd.f32 %v1019, 1.0
          %v1089 = vadd.f32 %v1020, 1.0
          %v1090 = vadd.f32 %v1021, 1.0
          %v1091 = vadd.f32 %v1022, 1.0
          %v1092 = vadd.f32 %v1023, 1.0
          %v1093 = vadd.f32 %v1024, 1.0
          %v1094 = vadd.f32 %v1025, 1.0
          %v1095 = vadd.f32 %v1026, 1.0
          %v1096 = vadd.f32 %v1027, 1.0
          %v1097 = vadd.f32 %v1028, 1.0
          %v1098 = vadd.f32 %v1029, 1.0
          %v1099 = vadd.f32 %v1030, 1.0
          %v1100 = vadd.f32 %v1031, 1.0
          %v1101 = vadd.f32 %v1032, 1.0
          %v1102 = vadd.f32 %v1033, 1.0
          %v1103 = vadd.f32 %v1034, 1.0
          %v1104 = vadd.f32 %v1035, 1.0
          %v1105 = vadd.f32 %v1036, 1.0
          %v1106 = vadd.f32 %v1037, 1.0
          %v1107 = vadd.f32 %v1038, 1.0
          %v1108 = vadd.f32 %v1039, 1.0
          %v1109 = vadd.f32 %v1040, 1.0
          %v1110 = vadd.f32 %v1041, 1.0
          %v1111 = vadd.f32 %v1042, 1.0
          %v1112 = vadd.f32 %v1043, 1.0
          %v1113 = vadd.f32 %v1044, 1.0
          %v1114 = vadd.f32 %v1045, 1.0
          %v1115 = vadd.f32 %v1046, 1.0
          %v1116 = vadd.f32 %v1047, 1.0
          %v1117 = vadd.f32 %v1048, 1.0
          %v1118 = vadd.f32 %v1049, 1.0
          %v1119 = vadd.f32 %v1050, 1.0
          %v1120 = vadd.f32 %v1051, 1.0
          %v1121 = vadd.f32 %v1052, 1.0
          %v1122 = vadd.f32 %v1053, 1.0
          %v1123 = vadd.f32 %v1054, 1.0
          %v1124 = vadd.f32 %v1055, 1.0
          %v1125 = vadd.f32 %v1056, 1.0
          %v1126 = vadd.f32 %v1057, 1.0
          %v1127 = vadd.f32 %v1058, 1.0
          %v1128 = vadd.f32 %v1059, 1.0
          %v1129 = vadd.f32 %v1060, 1.0
          %v1130 = vadd.f32 %v1061, 1.0
          %v1131 = vadd.f32 %v1062, 1.0
          %v1132 = vadd.f32 %v1063, 1.0
          %v1133 = vadd.f32 %v1064, 1.0
          %v1134 = vadd.f32 %v1065, 1.0
          %v1135 = vadd.f32 %v1066, 1.0
          %v1136 = vadd.f32 %v1067, 1.0
          %v1137 = vadd.f32 %v1068, 1.0
          %v1138 = vadd.f32 %v1069, 1.0
          %v1139 = vadd.f32 %v1070, 1.0
          %v1140 = vadd.f32 %v1071, 1.0
          %v1141 = vadd.f32 %v1072, 1.0
          %v1142 = vadd.f32 %v1073, 1.0
          %v1143 = vadd.f32 %v1074, 1.0
          %v1144 = vadd.f32 %v1075, 1.0
          %v1145 = vadd.f32 %v1076, 1.0
          %v1146 = vadd.f32 %v1077, 1.0
          %v1147 = vadd.f32 %v1078, 1.0
          %v1148 = vadd.f32 %v1079, 1.0
          %v1149 = vadd.f32 %v1080, 1.0
          %v1150 = vadd.f32 %v1081, 1.0
          %v1151 = vadd.f32 %v1082, 1.0
          %v1152 = vadd.f32 %v1083, 1.0
          %v1153 = vadd.f32 %v1084, 1.0
          %v1154 = vadd.f32 %v1085, 1.0
          %v1155 = vadd.f32 %v1086, 1.0
          %v1156 = vadd.f32 %v1087, 1.0
          %v1157 = vrcp.pop %v1088
          %v1158 = vrcp.pop %v1089
          %v1159 = vrcp.pop %v1090
          %v1160 = vrcp.pop %v1091
          %v1161 = vrcp.pop %v1092
          %v1162 = vrcp.pop %v1093
          %v1163 = vrcp.pop %v1094
          %v1164 = vrcp.pop %v1095
          %v1165 = vrcp.pop %v1096
          %v1166 = vrcp.pop %v1097
          %v1167 = vrcp.pop %v1098
          %v1168 = vrcp.pop %v1099
          %v1169 = vrcp.pop %v1100
          %v1170 = vrcp.pop %v1101
          %v1171 = vrcp.pop %v1102
          %v1172 = vrcp.pop %v1103
          %v1173 = vrcp.pop %v1104
          %v1174 = vrcp.pop %v1105
          %v1175 = vrcp.pop %v1106
          %v1176 = vrcp.pop %v1107
          %v1177 = vrcp.pop %v1108
          %v1178 = vrcp.pop %v1109
          %v1179 = vrcp.pop %v1110
          %v1180 = vrcp.pop %v1111
          %v1181 = vrcp.pop %v1112
          %v1182 = vrcp.pop %v1113
          %v1183 = vrcp.pop %v1114
          %v1184 = vrcp.pop %v1115
          %v1185 = vrcp.pop %v1116
          %v1186 = vrcp.pop %v1117
          %v1187 = vrcp.pop %v1118
          %v1188 = vrcp.pop %v1119
          %v1189 = vrcp.pop %v1120
          %v1190 = vrcp.pop %v1121
          %v1191 = vrcp.pop %v1122
          %v1192 = vrcp.pop %v1123
          %v1193 = vrcp.pop %v1124
          %v1194 = vrcp.pop %v1125
          %v1195 = vrcp.pop %v1126
          %v1196 = vrcp.pop %v1127
          %v1197 = vrcp.pop %v1128
          %v1198 = vrcp.pop %v1129
          %v1199 = vrcp.pop %v1130
          %v1200 = vrcp.pop %v1131
          %v1201 = vrcp.pop %v1132
          %v1202 = vrcp.pop %v1133
          %v1203 = vrcp.pop %v1134
          %v1204 = vrcp.pop %v1135
          %v1205 = vrcp.pop %v1136
          %v1206 = vrcp.pop %v1137
          %v1207 = vrcp.pop %v1138
          %v1208 = vrcp.pop %v1139
          %v1209 = vrcp.pop %v1140
          %v1210 = vrcp.pop %v1141
          %v1211 = vrcp.pop %v1142
          %v1212 = vrcp.pop %v1143
          %v1213 = vrcp.pop %v1144
          %v1214 = vrcp.pop %v1145
          %v1215 = vrcp.pop %v1146
          %v1216 = vrcp.pop %v1147
          %v1217 = vrcp.pop %v1148
          %v1218 = vrcp.pop %v1149
          %v1219 = vrcp.pop %v1150
          %v1220 = vrcp.pop %v1151
          %v1221 = vrcp.pop %v1152
          %v1222 = vrcp.pop %v1153
          %v1223 = vrcp.pop %v1154
          %v1224 = vrcp.pop %v1155
          %v1225 = vrcp.pop %v1156
          %v1226 = vmul.f32 %v1157, %v779
          %v1227 = vmul.f32 %v1158, %v865
          %v1228 = vmul.f32 %v1159, %v951
          %v1229 = vmul.f32 %v1160, %v782
          %v1230 = vmul.f32 %v1161, %v868
          %v1231 = vmul.f32 %v1162, %v954
          %v1232 = vmul.f32 %v1163, %v785
          %v1233 = vmul.f32 %v1164, %v871
          %v1234 = vmul.f32 %v1165, %v957
          %v1235 = vmul.f32 %v1166, %v788
          %v1236 = vmul.f32 %v1167, %v874
          %v1237 = vmul.f32 %v1168, %v960
          %v1238 = vmul.f32 %v1169, %v791
          %v1239 = vmul.f32 %v1170, %v877
          %v1240 = vmul.f32 %v1171, %v963
          %v1241 = vmul.f32 %v1172, %v794
          %v1242 = vmul.f32 %v1173, %v880
          %v1243 = vmul.f32 %v1174, %v966
          %v1244 = vmul.f32 %v1175, %v797
          %v1245 = vmul.f32 %v1176, %v883
          %v1246 = vmul.f32 %v1177, %v969
          %v1247 = vmul.f32 %v1178, %v800
          %v1248 = vmul.f32 %v1179, %v886
          %v1249 = vmul.f32 %v1180, %v972
          %v1250 = vmul.f32 %v1181, %v803
          %v1251 = vmul.f32 %v1182, %v889
          %v1252 = vmul.f32 %v1183, %v975
          %v1253 = vmul.f32 %v1184, %v806
          %v1254 = vmul.f32 %v1185, %v892
          %v1255 = vmul.f32 %v1186, %v978
          %v1256 = vmul.f32 %v1187, %v809
          %v1257 = vmul.f32 %v1188, %v895
          %v1258 = vmul.f32 %v1189, %v981
          %v1259 = vmul.f32 %v1190, %v812
          %v1260 = vmul.f32 %v1191, %v898
          %v1261 = vmul.f32 %v1192, %v984
          %v1262 = vmul.f32 %v1193, %v815
          %v1263 = vmul.f32 %v1194, %v901
          %v1264 = vmul.f32 %v1195, %v987
          %v1265 = vmul.f32 %v1196, %v818
          %v1266 = vmul.f32 %v1197, %v904
          %v1267 = vmul.f32 %v1198, %v990
          %v1268 = vmul.f32 %v1199, %v821
          %v1269 = vmul.f32 %v1200, %v907
          %v1270 = vmul.f32 %v1201, %v993
          %v1271 = vmul.f32 %v1202, %v824
          %v1272 = vmul.f32 %v1203, %v910
          %v1273 = vmul.f32 %v1204, %v996
          %v1274 = vmul.f32 %v1205, %v827
          %v1275 = vmul.f32 %v1206, %v913
          %v1276 = vmul.f32 %v1207, %v999
          %v1277 = vmul.f32 %v1208, %v830
          %v1278 = vmul.f32 %v1209, %v916
          %v1279 = vmul.f32 %v1210, %v1002
          %v1280 = vmul.f32 %v1211, %v833
          %v1281 = vmul.f32 %v1212, %v919
          %v1282 = vmul.f32 %v1213, %v1005
          %v1283 = vmul.f32 %v1214, %v836
          %v1284 = vmul.f32 %v1215, %v922
          %v1285 = vmul.f32 %v1216, %v1008
          %v1286 = vmul.f32 %v1217, %v839
          %v1287 = vmul.f32 %v1218, %v925
          %v1288 = vmul.f32 %v1219, %v1011
          %v1289 = vmul.f32 %v1220, %v842
          %v1290 = vmul.f32 %v1221, %v928
          %v1291 = vmul.f32 %v1222, %v1014
          %v1292 = vmul.f32 %v1223, %v845
          %v1293 = vmul.f32 %v1224, %v931
          %v1294 = vmul.f32 %v1225, %v1017
          %v1295 = vadd.f32 %v1226, %v1229
          %v1296 = vadd.f32 %v1295, %v1232
          %v1297 = vadd.f32 %v1296, %v1235
          %v1298 = vadd.f32 %v1297, %v1238
          %v1299 = vadd.f32 %v1298, %v1241
          %v1300 = vadd.f32 %v1299, %v1244
          %v1301 = vadd.f32 %v1300, %v1247
          %v1302 = vadd.f32 %v1301, %v1250
          %v1303 = vadd.f32 %v1302, %v1253
          %v1304 = vadd.f32 %v1303, %v1256
          %v1305 = vadd.f32 %v1304, %v1259
          %v1306 = vadd.f32 %v1305, %v1262
          %v1307 = vadd.f32 %v1306, %v1265
          %v1308 = vadd.f32 %v1307, %v1268
          %v1309 = vadd.f32 %v1308, %v1271
          %v1310 = vadd.f32 %v1309, %v1274
          %v1311 = vadd.f32 %v1310, %v1277
          %v1312 = vadd.f32 %v1311, %v1280
          %v1313 = vadd.f32 %v1312, %v1283
          %v1314 = vadd.f32 %v1313, %v1286
          %v1315 = vadd.f32 %v1314, %v1289
          %v1316 = vadd.f32 %v1315, %v1292
          %v1317 = vrot.slane %v1316, 4
          %v1318 = vadd.f32 %v1316, %v1317
          %v1319 = vrot.slane %v1318, 2
          %v1320 = vadd.f32 %v1318, %v1319
          %v1321 = vrot.slane %v1320, 1
          %v1322 = vadd.f32 %v1320, %v1321
          %v1323 = vadd.f32 %v1227, %v1230
          %v1324 = vadd.f32 %v1323, %v1233
          %v1325 = vadd.f32 %v1324, %v1236
          %v1326 = vadd.f32 %v1325, %v1239
          %v1327 = vadd.f32 %v1326, %v1242
          %v1328 = vadd.f32 %v1327, %v1245
          %v1329 = vadd.f32 %v1328, %v1248
          %v1330 = vadd.f32 %v1329, %v1251
          %v1331 = vadd.f32 %v1330, %v1254
          %v1332 = vadd.f32 %v1331, %v1257
          %v1333 = vadd.f32 %v1332, %v1260
          %v1334 = vadd.f32 %v1333, %v1263
          %v1335 = vadd.f32 %v1334, %v1266
          %v1336 = vadd.f32 %v1335, %v1269
          %v1337 = vadd.f32 %v1336, %v1272
          %v1338 = vadd.f32 %v1337, %v1275
          %v1339 = vadd.f32 %v1338, %v1278
          %v1340 = vadd.f32 %v1339, %v1281
          %v1341 = vadd.f32 %v1340, %v1284
          %v1342 = vadd.f32 %v1341, %v1287
          %v1343 = vadd.f32 %v1342, %v1290
          %v1344 = vadd.f32 %v1343, %v1293
          %v1345 = vrot.slane %v1344, 4
          %v1346 = vadd.f32 %v1344, %v1345
          %v1347 = vrot.slane %v1346, 2
          %v1348 = vadd.f32 %v1346, %v1347
          %v1349 = vrot.slane %v1348, 1
          %v1350 = vadd.f32 %v1348, %v1349
          %v1351 = vadd.f32 %v1228, %v1231
          %v1352 = vadd.f32 %v1351, %v1234
          %v1353 = vadd.f32 %v1352, %v1237
          %v1354 = vadd.f32 %v1353, %v1240
          %v1355 = vadd.f32 %v1354, %v1243
          %v1356 = vadd.f32 %v1355, %v1246
          %v1357 = vadd.f32 %v1356, %v1249
          %v1358 = vadd.f32 %v1357, %v1252
          %v1359 = vadd.f32 %v1358, %v1255
          %v1360 = vadd.f32 %v1359, %v1258
          %v1361 = vadd.f32 %v1360, %v1261
          %v1362 = vadd.f32 %v1361, %v1264
          %v1363 = vadd.f32 %v1362, %v1267
          %v1364 = vadd.f32 %v1363, %v1270
          %v1365 = vadd.f32 %v1364, %v1273
          %v1366 = vadd.f32 %v1365, %v1276
          %v1367 = vadd.f32 %v1366, %v1279
          %v1368 = vadd.f32 %v1367, %v1282
          %v1369 = vadd.f32 %v1368, %v1285
          %v1370 = vadd.f32 %v1369, %v1288
          %v1371 = vadd.f32 %v1370, %v1291
          %v1372 = vadd.f32 %v1371, %v1294
          %v1373 = vrot.slane %v1372, 4
          %v1374 = vadd.f32 %v1372, %v1373
          %v1375 = vrot.slane %v1374, 2
          %v1376 = vadd.f32 %v1374, %v1375
          %v1377 = vrot.slane %v1376, 1
          %v1378 = vadd.f32 %v1376, %v1377
          %v1379 = vmul.f32 %v1322, 2.0
          %v1380 = vmul.f32 %v1350, 2.0
          %v1381 = vmul.f32 %v1378, 2.0
          %v1382 = vld [vmem:[#allocation2] sm:$0x7]
          %v1386 = vrot.slane %v1380, 7
          %v1387 = vrot.slane %v1381, 6
          %vm1388 = vcmask 1040384
          %v1389 = vsel %vm1388, %v1379, %v1386
          %vm1390 = vcmask 1041408
          %v1391 = vsel %vm1390, %v1389, %v1387
          %v1393 = vadd.f32 %v1382, %v1391
          %v1394 = vlaneseq
          %vm1395 = vcmp.ge.s32.totalorder %v1394, 0
          %vm1396 = vcmp.lt.s32.totalorder %v1394, 384
          %vm1397 = vmand %vm1395, %vm1396
          %1398 = vst.msk [vmem:[#allocation2] sm:$0x7] %vm1397, %v1393
        $region40: #{tpu_custom_call.1} parent=31 // pred_fallthru
          _
        %p1399 = scmp.lt.s32.totalorder %s228, %s238
        %s1400 = sadd.s32 %s228, 384
        %p1401 = scmp.gt.s32.totalorder %s1400, %s227
        %p1402 = pnand %p1399, %p1401
        %p1403 = pneg %p1402
        // Predicated region
        $region41: #{tpu_custom_call.1} parent=31 // pred_check
          _
        $region42: #{tpu_custom_call.1} parent=31 // pred_check_branch
          %1405 = sbr.rel (%p1402) target = $region44
        $region43: #{tpu_custom_call.1} parent=31 // pred_region
          %v1406 = vld [vmem:[%s213] sm:$0xff]
          %v1407 = vld [vmem:[%s213 + $0x8] sm:$0xff]
          %v1408 = vld [vmem:[%s213 + $0x10] sm:$0xff]
          %v1409 = vld [vmem:[%s213 + $0x18] sm:$0xff]
          %v1410 = vld [vmem:[%s213 + $0x20] sm:$0xff]
          %v1411 = vld [vmem:[%s213 + $0x28] sm:$0xff]
          %v1412 = vld [vmem:[%s213 + $0x30] sm:$0xff]
          %v1413 = vld [vmem:[%s213 + $0x38] sm:$0xff]
          %v1414 = vld [vmem:[%s213 + $0x40] sm:$0xff]
          %v1415 = vld [vmem:[%s213 + $0x48] sm:$0xff]
          %v1416 = vld [vmem:[%s213 + $0x50] sm:$0xff]
          %v1417 = vld [vmem:[%s213 + $0x58] sm:$0xff]
          %v1418 = vld [vmem:[%s213 + $0x60] sm:$0xff]
          %v1419 = vld [vmem:[%s213 + $0x68] sm:$0xff]
          %v1420 = vld [vmem:[%s213 + $0x70] sm:$0xff]
          %v1421 = vld [vmem:[%s213 + $0x78] sm:$0xff]
          %v1422 = vld [vmem:[%s213 + $0x80] sm:$0xff]
          %v1423 = vld [vmem:[%s213 + $0x88] sm:$0xff]
          %v1424 = vld [vmem:[%s213 + $0x90] sm:$0xff]
          %v1425 = vld [vmem:[%s213 + $0x98] sm:$0xff]
          %v1426 = vld [vmem:[%s213 + $0xa0] sm:$0xff]
          %v1427 = vld [vmem:[%s213 + $0xa8] sm:$0xff]
          %v1428 = vld [vmem:[%s213 + $0xb0] sm:$0xff]
          %v1429 = vld [vmem:[%s219] sm:$0xff]
          %v1430 = vld [vmem:[%s219 + $0x8] sm:$0xff]
          %v1431 = vld [vmem:[%s219 + $0x10] sm:$0xff]
          %v1432 = vld [vmem:[%s219 + $0x18] sm:$0xff]
          %v1433 = vld [vmem:[%s219 + $0x20] sm:$0xff]
          %v1434 = vld [vmem:[%s219 + $0x28] sm:$0xff]
          %v1435 = vld [vmem:[%s219 + $0x30] sm:$0xff]
          %v1436 = vld [vmem:[%s219 + $0x38] sm:$0xff]
          %v1437 = vld [vmem:[%s219 + $0x40] sm:$0xff]
          %v1438 = vld [vmem:[%s219 + $0x48] sm:$0xff]
          %v1439 = vld [vmem:[%s219 + $0x50] sm:$0xff]
          %v1440 = vld [vmem:[%s219 + $0x58] sm:$0xff]
          %v1441 = vld [vmem:[%s219 + $0x60] sm:$0xff]
          %v1442 = vld [vmem:[%s219 + $0x68] sm:$0xff]
          %v1443 = vld [vmem:[%s219 + $0x70] sm:$0xff]
          %v1444 = vld [vmem:[%s219 + $0x78] sm:$0xff]
          %v1445 = vld [vmem:[%s219 + $0x80] sm:$0xff]
          %v1446 = vld [vmem:[%s219 + $0x88] sm:$0xff]
          %v1447 = vld [vmem:[%s219 + $0x90] sm:$0xff]
          %v1448 = vld [vmem:[%s219 + $0x98] sm:$0xff]
          %v1449 = vld [vmem:[%s219 + $0xa0] sm:$0xff]
          %v1450 = vld [vmem:[%s219 + $0xa8] sm:$0xff]
          %v1451 = vld [vmem:[%s219 + $0xb0] sm:$0xff]
          %v1452 = vld [vmem:[%s225] sm:$0xff]
          %v1453 = vld [vmem:[%s225 + $0x8] sm:$0xff]
          %v1454 = vld [vmem:[%s225 + $0x10] sm:$0xff]
          %v1455 = vld [vmem:[%s225 + $0x18] sm:$0xff]
          %v1456 = vld [vmem:[%s225 + $0x20] sm:$0xff]
          %v1457 = vld [vmem:[%s225 + $0x28] sm:$0xff]
          %vm1458 = vcmask 64512
          %v1460 = vsel %vm1458, %v1406, 0
          %v1463 = vsel %vm1458, %v1407, 0
          %v1466 = vsel %vm1458, %v1408, 0
          %v1469 = vsel %vm1458, %v1409, 0
          %v1472 = vsel %vm1458, %v1410, 0
          %v1475 = vsel %vm1458, %v1411, 0
          %v1478 = vsel %vm1458, %v1412, 0
          %v1481 = vsel %vm1458, %v1413, 0
          %v1484 = vsel %vm1458, %v1414, 0
          %v1487 = vsel %vm1458, %v1415, 0
          %v1490 = vsel %vm1458, %v1416, 0
          %v1493 = vsel %vm1458, %v1417, 0
          %v1496 = vsel %vm1458, %v1418, 0
          %v1499 = vsel %vm1458, %v1419, 0
          %v1502 = vsel %vm1458, %v1420, 0
          %v1505 = vsel %vm1458, %v1421, 0
          %v1508 = vsel %vm1458, %v1422, 0
          %v1511 = vsel %vm1458, %v1423, 0
          %v1514 = vsel %vm1458, %v1424, 0
          %v1517 = vsel %vm1458, %v1425, 0
          %v1520 = vsel %vm1458, %v1426, 0
          %v1523 = vsel %vm1458, %v1427, 0
          %v1526 = vsel %vm1458, %v1428, 0
          %1528 = vmatpush.msra.mxu0 0.0
          %1529 = vmatpush.msra.mxu0 0.0
          %1530 = vmatpush.msra.mxu0 0.0
          %1531 = vmatpush.msra.mxu0 0.0
          %1532 = vmatpush.msra.mxu0 0.0
          %1533 = vmatpush.msra.mxu0 0.0
          %1534 = vmatpush.msra.mxu0 0.0
          %1535 = vmatpush.msra.mxu0 0.0
          %1536 = vmatpush.msra.mxu0 0.0
          %1537 = vmatpush.msra.mxu0 0.0
          %1538 = vmatpush.msra.mxu0 0.0
          %1539 = vmatpush.msra.mxu0 0.0
          %1540 = vmatpush.msra.mxu0 0.0
          %1541 = vmatpush.msra.mxu0 0.0
          %1542 = vmatpush.msra.mxu0 0.0
          %1543 = vmatpush.msra.mxu0 %v1452
          %1544 = vmatmul.f32.gmra.mxu0 %v1460
          %v1545 = vpop.f32.mrf.mxu0
          %v1546 = vadd.f32 0.0, %v1545
          %1547 = vmatmul.f32.gmra.mxu0 %v1463
          %v1548 = vpop.f32.mrf.mxu0
          %v1549 = vadd.f32 0.0, %v1548
          %1550 = vmatmul.f32.gmra.mxu0 %v1466
          %v1551 = vpop.f32.mrf.mxu0
          %v1552 = vadd.f32 0.0, %v1551
          %1553 = vmatmul.f32.gmra.mxu0 %v1469
          %v1554 = vpop.f32.mrf.mxu0
          %v1555 = vadd.f32 0.0, %v1554
          %1556 = vmatmul.f32.gmra.mxu0 %v1472
          %v1557 = vpop.f32.mrf.mxu0
          %v1558 = vadd.f32 0.0, %v1557
          %1559 = vmatmul.f32.gmra.mxu0 %v1475
          %v1560 = vpop.f32.mrf.mxu0
          %v1561 = vadd.f32 0.0, %v1560
          %1562 = vmatmul.f32.gmra.mxu0 %v1478
          %v1563 = vpop.f32.mrf.mxu0
          %v1564 = vadd.f32 0.0, %v1563
          %1565 = vmatmul.f32.gmra.mxu0 %v1481
          %v1566 = vpop.f32.mrf.mxu0
          %v1567 = vadd.f32 0.0, %v1566
          %1568 = vmatmul.f32.gmra.mxu0 %v1484
          %v1569 = vpop.f32.mrf.mxu0
          %v1570 = vadd.f32 0.0, %v1569
          %1571 = vmatmul.f32.gmra.mxu0 %v1487
          %v1572 = vpop.f32.mrf.mxu0
          %v1573 = vadd.f32 0.0, %v1572
          %1574 = vmatmul.f32.gmra.mxu0 %v1490
          %v1575 = vpop.f32.mrf.mxu0
          %v1576 = vadd.f32 0.0, %v1575
          %1577 = vmatmul.f32.gmra.mxu0 %v1493
          %v1578 = vpop.f32.mrf.mxu0
          %v1579 = vadd.f32 0.0, %v1578
          %1580 = vmatmul.f32.gmra.mxu0 %v1496
          %v1581 = vpop.f32.mrf.mxu0
          %v1582 = vadd.f32 0.0, %v1581
          %1583 = vmatmul.f32.gmra.mxu0 %v1499
          %v1584 = vpop.f32.mrf.mxu0
          %v1585 = vadd.f32 0.0, %v1584
          %1586 = vmatmul.f32.gmra.mxu0 %v1502
          %v1587 = vpop.f32.mrf.mxu0
          %v1588 = vadd.f32 0.0, %v1587
          %1589 = vmatmul.f32.gmra.mxu0 %v1505
          %v1590 = vpop.f32.mrf.mxu0
          %v1591 = vadd.f32 0.0, %v1590
          %1592 = vmatmul.f32.gmra.mxu0 %v1508
          %v1593 = vpop.f32.mrf.mxu0
          %v1594 = vadd.f32 0.0, %v1593
          %1595 = vmatmul.f32.gmra.mxu0 %v1511
          %v1596 = vpop.f32.mrf.mxu0
          %v1597 = vadd.f32 0.0, %v1596
          %1598 = vmatmul.f32.gmra.mxu0 %v1514
          %v1599 = vpop.f32.mrf.mxu0
          %v1600 = vadd.f32 0.0, %v1599
          %1601 = vmatmul.f32.gmra.mxu0 %v1517
          %v1602 = vpop.f32.mrf.mxu0
          %v1603 = vadd.f32 0.0, %v1602
          %1604 = vmatmul.f32.gmra.mxu0 %v1520
          %v1605 = vpop.f32.mrf.mxu0
          %v1606 = vadd.f32 0.0, %v1605
          %1607 = vmatmul.f32.gmra.mxu0 %v1523
          %v1608 = vpop.f32.mrf.mxu0
          %v1609 = vadd.f32 0.0, %v1608
          %1610 = vmatmul.f32.gmra.mxu0 %v1526
          %v1611 = vpop.f32.mrf.mxu0
          %v1612 = vadd.f32 0.0, %v1611
          %1613 = vdwg.mxu0
          %1614 = vmatpush.msra.mxu0 0.0
          %1615 = vmatpush.msra.mxu0 0.0
          %1616 = vmatpush.msra.mxu0 0.0
          %1617 = vmatpush.msra.mxu0 0.0
          %1618 = vmatpush.msra.mxu0 0.0
          %1619 = vmatpush.msra.mxu0 0.0
          %1620 = vmatpush.msra.mxu0 0.0
          %1621 = vmatpush.msra.mxu0 0.0
          %1622 = vmatpush.msra.mxu0 0.0
          %1623 = vmatpush.msra.mxu0 0.0
          %1624 = vmatpush.msra.mxu0 0.0
          %1625 = vmatpush.msra.mxu0 0.0
          %1626 = vmatpush.msra.mxu0 0.0
          %1627 = vmatpush.msra.mxu0 0.0
          %1628 = vmatpush.msra.mxu0 0.0
          %1629 = vmatpush.msra.mxu0 %v1453
          %1630 = vmatmul.f32.gmra.mxu0 %v1460
          %v1631 = vpop.f32.mrf.mxu0
          %v1632 = vadd.f32 0.0, %v1631
          %1633 = vmatmul.f32.gmra.mxu0 %v1463
          %v1634 = vpop.f32.mrf.mxu0
          %v1635 = vadd.f32 0.0, %v1634
          %1636 = vmatmul.f32.gmra.mxu0 %v1466
          %v1637 = vpop.f32.mrf.mxu0
          %v1638 = vadd.f32 0.0, %v1637
          %1639 = vmatmul.f32.gmra.mxu0 %v1469
          %v1640 = vpop.f32.mrf.mxu0
          %v1641 = vadd.f32 0.0, %v1640
          %1642 = vmatmul.f32.gmra.mxu0 %v1472
          %v1643 = vpop.f32.mrf.mxu0
          %v1644 = vadd.f32 0.0, %v1643
          %1645 = vmatmul.f32.gmra.mxu0 %v1475
          %v1646 = vpop.f32.mrf.mxu0
          %v1647 = vadd.f32 0.0, %v1646
          %1648 = vmatmul.f32.gmra.mxu0 %v1478
          %v1649 = vpop.f32.mrf.mxu0
          %v1650 = vadd.f32 0.0, %v1649
          %1651 = vmatmul.f32.gmra.mxu0 %v1481
          %v1652 = vpop.f32.mrf.mxu0
          %v1653 = vadd.f32 0.0, %v1652
          %1654 = vmatmul.f32.gmra.mxu0 %v1484
          %v1655 = vpop.f32.mrf.mxu0
          %v1656 = vadd.f32 0.0, %v1655
          %1657 = vmatmul.f32.gmra.mxu0 %v1487
          %v1658 = vpop.f32.mrf.mxu0
          %v1659 = vadd.f32 0.0, %v1658
          %1660 = vmatmul.f32.gmra.mxu0 %v1490
          %v1661 = vpop.f32.mrf.mxu0
          %v1662 = vadd.f32 0.0, %v1661
          %1663 = vmatmul.f32.gmra.mxu0 %v1493
          %v1664 = vpop.f32.mrf.mxu0
          %v1665 = vadd.f32 0.0, %v1664
          %1666 = vmatmul.f32.gmra.mxu0 %v1496
          %v1667 = vpop.f32.mrf.mxu0
          %v1668 = vadd.f32 0.0, %v1667
          %1669 = vmatmul.f32.gmra.mxu0 %v1499
          %v1670 = vpop.f32.mrf.mxu0
          %v1671 = vadd.f32 0.0, %v1670
          %1672 = vmatmul.f32.gmra.mxu0 %v1502
          %v1673 = vpop.f32.mrf.mxu0
          %v1674 = vadd.f32 0.0, %v1673
          %1675 = vmatmul.f32.gmra.mxu0 %v1505
          %v1676 = vpop.f32.mrf.mxu0
          %v1677 = vadd.f32 0.0, %v1676
          %1678 = vmatmul.f32.gmra.mxu0 %v1508
          %v1679 = vpop.f32.mrf.mxu0
          %v1680 = vadd.f32 0.0, %v1679
          %1681 = vmatmul.f32.gmra.mxu0 %v1511
          %v1682 = vpop.f32.mrf.mxu0
          %v1683 = vadd.f32 0.0, %v1682
          %1684 = vmatmul.f32.gmra.mxu0 %v1514
          %v1685 = vpop.f32.mrf.mxu0
          %v1686 = vadd.f32 0.0, %v1685
          %1687 = vmatmul.f32.gmra.mxu0 %v1517
          %v1688 = vpop.f32.mrf.mxu0
          %v1689 = vadd.f32 0.0, %v1688
          %1690 = vmatmul.f32.gmra.mxu0 %v1520
          %v1691 = vpop.f32.mrf.mxu0
          %v1692 = vadd.f32 0.0, %v1691
          %1693 = vmatmul.f32.gmra.mxu0 %v1523
          %v1694 = vpop.f32.mrf.mxu0
          %v1695 = vadd.f32 0.0, %v1694
          %1696 = vmatmul.f32.gmra.mxu0 %v1526
          %v1697 = vpop.f32.mrf.mxu0
          %v1698 = vadd.f32 0.0, %v1697
          %1699 = vdwg.mxu0
          %1700 = vmatpush.msra.mxu0 0.0
          %1701 = vmatpush.msra.mxu0 0.0
          %1702 = vmatpush.msra.mxu0 0.0
          %1703 = vmatpush.msra.mxu0 0.0
          %1704 = vmatpush.msra.mxu0 0.0
          %1705 = vmatpush.msra.mxu0 0.0
          %1706 = vmatpush.msra.mxu0 0.0
          %1707 = vmatpush.msra.mxu0 0.0
          %1708 = vmatpush.msra.mxu0 0.0
          %1709 = vmatpush.msra.mxu0 0.0
          %1710 = vmatpush.msra.mxu0 0.0
          %1711 = vmatpush.msra.mxu0 0.0
          %1712 = vmatpush.msra.mxu0 0.0
          %1713 = vmatpush.msra.mxu0 0.0
          %1714 = vmatpush.msra.mxu0 0.0
          %1715 = vmatpush.msra.mxu0 %v1454
          %1716 = vmatmul.f32.gmra.mxu0 %v1460
          %v1717 = vpop.f32.mrf.mxu0
          %v1718 = vadd.f32 0.0, %v1717
          %1719 = vmatmul.f32.gmra.mxu0 %v1463
          %v1720 = vpop.f32.mrf.mxu0
          %v1721 = vadd.f32 0.0, %v1720
          %1722 = vmatmul.f32.gmra.mxu0 %v1466
          %v1723 = vpop.f32.mrf.mxu0
          %v1724 = vadd.f32 0.0, %v1723
          %1725 = vmatmul.f32.gmra.mxu0 %v1469
          %v1726 = vpop.f32.mrf.mxu0
          %v1727 = vadd.f32 0.0, %v1726
          %1728 = vmatmul.f32.gmra.mxu0 %v1472
          %v1729 = vpop.f32.mrf.mxu0
          %v1730 = vadd.f32 0.0, %v1729
          %1731 = vmatmul.f32.gmra.mxu0 %v1475
          %v1732 = vpop.f32.mrf.mxu0
          %v1733 = vadd.f32 0.0, %v1732
          %1734 = vmatmul.f32.gmra.mxu0 %v1478
          %v1735 = vpop.f32.mrf.mxu0
          %v1736 = vadd.f32 0.0, %v1735
          %1737 = vmatmul.f32.gmra.mxu0 %v1481
          %v1738 = vpop.f32.mrf.mxu0
          %v1739 = vadd.f32 0.0, %v1738
          %1740 = vmatmul.f32.gmra.mxu0 %v1484
          %v1741 = vpop.f32.mrf.mxu0
          %v1742 = vadd.f32 0.0, %v1741
          %1743 = vmatmul.f32.gmra.mxu0 %v1487
          %v1744 = vpop.f32.mrf.mxu0
          %v1745 = vadd.f32 0.0, %v1744
          %1746 = vmatmul.f32.gmra.mxu0 %v1490
          %v1747 = vpop.f32.mrf.mxu0
          %v1748 = vadd.f32 0.0, %v1747
          %1749 = vmatmul.f32.gmra.mxu0 %v1493
          %v1750 = vpop.f32.mrf.mxu0
          %v1751 = vadd.f32 0.0, %v1750
          %1752 = vmatmul.f32.gmra.mxu0 %v1496
          %v1753 = vpop.f32.mrf.mxu0
          %v1754 = vadd.f32 0.0, %v1753
          %1755 = vmatmul.f32.gmra.mxu0 %v1499
          %v1756 = vpop.f32.mrf.mxu0
          %v1757 = vadd.f32 0.0, %v1756
          %1758 = vmatmul.f32.gmra.mxu0 %v1502
          %v1759 = vpop.f32.mrf.mxu0
          %v1760 = vadd.f32 0.0, %v1759
          %1761 = vmatmul.f32.gmra.mxu0 %v1505
          %v1762 = vpop.f32.mrf.mxu0
          %v1763 = vadd.f32 0.0, %v1762
          %1764 = vmatmul.f32.gmra.mxu0 %v1508
          %v1765 = vpop.f32.mrf.mxu0
          %v1766 = vadd.f32 0.0, %v1765
          %1767 = vmatmul.f32.gmra.mxu0 %v1511
          %v1768 = vpop.f32.mrf.mxu0
          %v1769 = vadd.f32 0.0, %v1768
          %1770 = vmatmul.f32.gmra.mxu0 %v1514
          %v1771 = vpop.f32.mrf.mxu0
          %v1772 = vadd.f32 0.0, %v1771
          %1773 = vmatmul.f32.gmra.mxu0 %v1517
          %v1774 = vpop.f32.mrf.mxu0
          %v1775 = vadd.f32 0.0, %v1774
          %1776 = vmatmul.f32.gmra.mxu0 %v1520
          %v1777 = vpop.f32.mrf.mxu0
          %v1778 = vadd.f32 0.0, %v1777
          %1779 = vmatmul.f32.gmra.mxu0 %v1523
          %v1780 = vpop.f32.mrf.mxu0
          %v1781 = vadd.f32 0.0, %v1780
          %1782 = vmatmul.f32.gmra.mxu0 %v1526
          %v1783 = vpop.f32.mrf.mxu0
          %v1784 = vadd.f32 0.0, %v1783
          %1785 = vdwg.mxu0
          %v1786 = vmax.f32 %v1546, 0.0
          %v1787 = vmax.f32 %v1632, 0.0
          %v1788 = vmax.f32 %v1718, 0.0
          %v1789 = vmax.f32 %v1549, 0.0
          %v1790 = vmax.f32 %v1635, 0.0
          %v1791 = vmax.f32 %v1721, 0.0
          %v1792 = vmax.f32 %v1552, 0.0
          %v1793 = vmax.f32 %v1638, 0.0
          %v1794 = vmax.f32 %v1724, 0.0
          %v1795 = vmax.f32 %v1555, 0.0
          %v1796 = vmax.f32 %v1641, 0.0
          %v1797 = vmax.f32 %v1727, 0.0
          %v1798 = vmax.f32 %v1558, 0.0
          %v1799 = vmax.f32 %v1644, 0.0
          %v1800 = vmax.f32 %v1730, 0.0
          %v1801 = vmax.f32 %v1561, 0.0
          %v1802 = vmax.f32 %v1647, 0.0
          %v1803 = vmax.f32 %v1733, 0.0
          %v1804 = vmax.f32 %v1564, 0.0
          %v1805 = vmax.f32 %v1650, 0.0
          %v1806 = vmax.f32 %v1736, 0.0
          %v1807 = vmax.f32 %v1567, 0.0
          %v1808 = vmax.f32 %v1653, 0.0
          %v1809 = vmax.f32 %v1739, 0.0
          %v1810 = vmax.f32 %v1570, 0.0
          %v1811 = vmax.f32 %v1656, 0.0
          %v1812 = vmax.f32 %v1742, 0.0
          %v1813 = vmax.f32 %v1573, 0.0
          %v1814 = vmax.f32 %v1659, 0.0
          %v1815 = vmax.f32 %v1745, 0.0
          %v1816 = vmax.f32 %v1576, 0.0
          %v1817 = vmax.f32 %v1662, 0.0
          %v1818 = vmax.f32 %v1748, 0.0
          %v1819 = vmax.f32 %v1579, 0.0
          %v1820 = vmax.f32 %v1665, 0.0
          %v1821 = vmax.f32 %v1751, 0.0
          %v1822 = vmax.f32 %v1582, 0.0
          %v1823 = vmax.f32 %v1668, 0.0
          %v1824 = vmax.f32 %v1754, 0.0
          %v1825 = vmax.f32 %v1585, 0.0
          %v1826 = vmax.f32 %v1671, 0.0
          %v1827 = vmax.f32 %v1757, 0.0
          %v1828 = vmax.f32 %v1588, 0.0
          %v1829 = vmax.f32 %v1674, 0.0
          %v1830 = vmax.f32 %v1760, 0.0
          %v1831 = vmax.f32 %v1591, 0.0
          %v1832 = vmax.f32 %v1677, 0.0
          %v1833 = vmax.f32 %v1763, 0.0
          %v1834 = vmax.f32 %v1594, 0.0
          %v1835 = vmax.f32 %v1680, 0.0
          %v1836 = vmax.f32 %v1766, 0.0
          %v1837 = vmax.f32 %v1597, 0.0
          %v1838 = vmax.f32 %v1683, 0.0
          %v1839 = vmax.f32 %v1769, 0.0
          %v1840 = vmax.f32 %v1600, 0.0
          %v1841 = vmax.f32 %v1686, 0.0
          %v1842 = vmax.f32 %v1772, 0.0
          %v1843 = vmax.f32 %v1603, 0.0
          %v1844 = vmax.f32 %v1689, 0.0
          %v1845 = vmax.f32 %v1775, 0.0
          %v1846 = vmax.f32 %v1606, 0.0
          %v1847 = vmax.f32 %v1692, 0.0
          %v1848 = vmax.f32 %v1778, 0.0
          %v1849 = vmax.f32 %v1609, 0.0
          %v1850 = vmax.f32 %v1695, 0.0
          %v1851 = vmax.f32 %v1781, 0.0
          %v1852 = vmax.f32 %v1612, 0.0
          %v1853 = vmax.f32 %v1698, 0.0
          %v1854 = vmax.f32 %v1784, 0.0
          %v1856 = vsel %vm1458, %v1429, 0
          %v1859 = vsel %vm1458, %v1430, 0
          %v1862 = vsel %vm1458, %v1431, 0
          %v1865 = vsel %vm1458, %v1432, 0
          %v1868 = vsel %vm1458, %v1433, 0
          %v1871 = vsel %vm1458, %v1434, 0
          %v1874 = vsel %vm1458, %v1435, 0
          %v1877 = vsel %vm1458, %v1436, 0
          %v1880 = vsel %vm1458, %v1437, 0
          %v1883 = vsel %vm1458, %v1438, 0
          %v1886 = vsel %vm1458, %v1439, 0
          %v1889 = vsel %vm1458, %v1440, 0
          %v1892 = vsel %vm1458, %v1441, 0
          %v1895 = vsel %vm1458, %v1442, 0
          %v1898 = vsel %vm1458, %v1443, 0
          %v1901 = vsel %vm1458, %v1444, 0
          %v1904 = vsel %vm1458, %v1445, 0
          %v1907 = vsel %vm1458, %v1446, 0
          %v1910 = vsel %vm1458, %v1447, 0
          %v1913 = vsel %vm1458, %v1448, 0
          %v1916 = vsel %vm1458, %v1449, 0
          %v1919 = vsel %vm1458, %v1450, 0
          %v1922 = vsel %vm1458, %v1451, 0
          %1924 = vmatpush.msra.mxu0 0.0
          %1925 = vmatpush.msra.mxu0 0.0
          %1926 = vmatpush.msra.mxu0 0.0
          %1927 = vmatpush.msra.mxu0 0.0
          %1928 = vmatpush.msra.mxu0 0.0
          %1929 = vmatpush.msra.mxu0 0.0
          %1930 = vmatpush.msra.mxu0 0.0
          %1931 = vmatpush.msra.mxu0 0.0
          %1932 = vmatpush.msra.mxu0 0.0
          %1933 = vmatpush.msra.mxu0 0.0
          %1934 = vmatpush.msra.mxu0 0.0
          %1935 = vmatpush.msra.mxu0 0.0
          %1936 = vmatpush.msra.mxu0 0.0
          %1937 = vmatpush.msra.mxu0 0.0
          %1938 = vmatpush.msra.mxu0 0.0
          %1939 = vmatpush.msra.mxu0 %v1455
          %1940 = vmatmul.f32.gmra.mxu0 %v1856
          %v1941 = vpop.f32.mrf.mxu0
          %v1942 = vadd.f32 0.0, %v1941
          %1943 = vmatmul.f32.gmra.mxu0 %v1859
          %v1944 = vpop.f32.mrf.mxu0
          %v1945 = vadd.f32 0.0, %v1944
          %1946 = vmatmul.f32.gmra.mxu0 %v1862
          %v1947 = vpop.f32.mrf.mxu0
          %v1948 = vadd.f32 0.0, %v1947
          %1949 = vmatmul.f32.gmra.mxu0 %v1865
          %v1950 = vpop.f32.mrf.mxu0
          %v1951 = vadd.f32 0.0, %v1950
          %1952 = vmatmul.f32.gmra.mxu0 %v1868
          %v1953 = vpop.f32.mrf.mxu0
          %v1954 = vadd.f32 0.0, %v1953
          %1955 = vmatmul.f32.gmra.mxu0 %v1871
          %v1956 = vpop.f32.mrf.mxu0
          %v1957 = vadd.f32 0.0, %v1956
          %1958 = vmatmul.f32.gmra.mxu0 %v1874
          %v1959 = vpop.f32.mrf.mxu0
          %v1960 = vadd.f32 0.0, %v1959
          %1961 = vmatmul.f32.gmra.mxu0 %v1877
          %v1962 = vpop.f32.mrf.mxu0
          %v1963 = vadd.f32 0.0, %v1962
          %1964 = vmatmul.f32.gmra.mxu0 %v1880
          %v1965 = vpop.f32.mrf.mxu0
          %v1966 = vadd.f32 0.0, %v1965
          %1967 = vmatmul.f32.gmra.mxu0 %v1883
          %v1968 = vpop.f32.mrf.mxu0
          %v1969 = vadd.f32 0.0, %v1968
          %1970 = vmatmul.f32.gmra.mxu0 %v1886
          %v1971 = vpop.f32.mrf.mxu0
          %v1972 = vadd.f32 0.0, %v1971
          %1973 = vmatmul.f32.gmra.mxu0 %v1889
          %v1974 = vpop.f32.mrf.mxu0
          %v1975 = vadd.f32 0.0, %v1974
          %1976 = vmatmul.f32.gmra.mxu0 %v1892
          %v1977 = vpop.f32.mrf.mxu0
          %v1978 = vadd.f32 0.0, %v1977
          %1979 = vmatmul.f32.gmra.mxu0 %v1895
          %v1980 = vpop.f32.mrf.mxu0
          %v1981 = vadd.f32 0.0, %v1980
          %1982 = vmatmul.f32.gmra.mxu0 %v1898
          %v1983 = vpop.f32.mrf.mxu0
          %v1984 = vadd.f32 0.0, %v1983
          %1985 = vmatmul.f32.gmra.mxu0 %v1901
          %v1986 = vpop.f32.mrf.mxu0
          %v1987 = vadd.f32 0.0, %v1986
          %1988 = vmatmul.f32.gmra.mxu0 %v1904
          %v1989 = vpop.f32.mrf.mxu0
          %v1990 = vadd.f32 0.0, %v1989
          %1991 = vmatmul.f32.gmra.mxu0 %v1907
          %v1992 = vpop.f32.mrf.mxu0
          %v1993 = vadd.f32 0.0, %v1992
          %1994 = vmatmul.f32.gmra.mxu0 %v1910
          %v1995 = vpop.f32.mrf.mxu0
          %v1996 = vadd.f32 0.0, %v1995
          %1997 = vmatmul.f32.gmra.mxu0 %v1913
          %v1998 = vpop.f32.mrf.mxu0
          %v1999 = vadd.f32 0.0, %v1998
          %2000 = vmatmul.f32.gmra.mxu0 %v1916
          %v2001 = vpop.f32.mrf.mxu0
          %v2002 = vadd.f32 0.0, %v2001
          %2003 = vmatmul.f32.gmra.mxu0 %v1919
          %v2004 = vpop.f32.mrf.mxu0
          %v2005 = vadd.f32 0.0, %v2004
          %2006 = vmatmul.f32.gmra.mxu0 %v1922
          %v2007 = vpop.f32.mrf.mxu0
          %v2008 = vadd.f32 0.0, %v2007
          %2009 = vdwg.mxu0
          %2010 = vmatpush.msra.mxu0 0.0
          %2011 = vmatpush.msra.mxu0 0.0
          %2012 = vmatpush.msra.mxu0 0.0
          %2013 = vmatpush.msra.mxu0 0.0
          %2014 = vmatpush.msra.mxu0 0.0
          %2015 = vmatpush.msra.mxu0 0.0
          %2016 = vmatpush.msra.mxu0 0.0
          %2017 = vmatpush.msra.mxu0 0.0
          %2018 = vmatpush.msra.mxu0 0.0
          %2019 = vmatpush.msra.mxu0 0.0
          %2020 = vmatpush.msra.mxu0 0.0
          %2021 = vmatpush.msra.mxu0 0.0
          %2022 = vmatpush.msra.mxu0 0.0
          %2023 = vmatpush.msra.mxu0 0.0
          %2024 = vmatpush.msra.mxu0 0.0
          %2025 = vmatpush.msra.mxu0 %v1456
          %2026 = vmatmul.f32.gmra.mxu0 %v1856
          %v2027 = vpop.f32.mrf.mxu0
          %v2028 = vadd.f32 0.0, %v2027
          %2029 = vmatmul.f32.gmra.mxu0 %v1859
          %v2030 = vpop.f32.mrf.mxu0
          %v2031 = vadd.f32 0.0, %v2030
          %2032 = vmatmul.f32.gmra.mxu0 %v1862
          %v2033 = vpop.f32.mrf.mxu0
          %v2034 = vadd.f32 0.0, %v2033
          %2035 = vmatmul.f32.gmra.mxu0 %v1865
          %v2036 = vpop.f32.mrf.mxu0
          %v2037 = vadd.f32 0.0, %v2036
          %2038 = vmatmul.f32.gmra.mxu0 %v1868
          %v2039 = vpop.f32.mrf.mxu0
          %v2040 = vadd.f32 0.0, %v2039
          %2041 = vmatmul.f32.gmra.mxu0 %v1871
          %v2042 = vpop.f32.mrf.mxu0
          %v2043 = vadd.f32 0.0, %v2042
          %2044 = vmatmul.f32.gmra.mxu0 %v1874
          %v2045 = vpop.f32.mrf.mxu0
          %v2046 = vadd.f32 0.0, %v2045
          %2047 = vmatmul.f32.gmra.mxu0 %v1877
          %v2048 = vpop.f32.mrf.mxu0
          %v2049 = vadd.f32 0.0, %v2048
          %2050 = vmatmul.f32.gmra.mxu0 %v1880
          %v2051 = vpop.f32.mrf.mxu0
          %v2052 = vadd.f32 0.0, %v2051
          %2053 = vmatmul.f32.gmra.mxu0 %v1883
          %v2054 = vpop.f32.mrf.mxu0
          %v2055 = vadd.f32 0.0, %v2054
          %2056 = vmatmul.f32.gmra.mxu0 %v1886
          %v2057 = vpop.f32.mrf.mxu0
          %v2058 = vadd.f32 0.0, %v2057
          %2059 = vmatmul.f32.gmra.mxu0 %v1889
          %v2060 = vpop.f32.mrf.mxu0
          %v2061 = vadd.f32 0.0, %v2060
          %2062 = vmatmul.f32.gmra.mxu0 %v1892
          %v2063 = vpop.f32.mrf.mxu0
          %v2064 = vadd.f32 0.0, %v2063
          %2065 = vmatmul.f32.gmra.mxu0 %v1895
          %v2066 = vpop.f32.mrf.mxu0
          %v2067 = vadd.f32 0.0, %v2066
          %2068 = vmatmul.f32.gmra.mxu0 %v1898
          %v2069 = vpop.f32.mrf.mxu0
          %v2070 = vadd.f32 0.0, %v2069
          %2071 = vmatmul.f32.gmra.mxu0 %v1901
          %v2072 = vpop.f32.mrf.mxu0
          %v2073 = vadd.f32 0.0, %v2072
          %2074 = vmatmul.f32.gmra.mxu0 %v1904
          %v2075 = vpop.f32.mrf.mxu0
          %v2076 = vadd.f32 0.0, %v2075
          %2077 = vmatmul.f32.gmra.mxu0 %v1907
          %v2078 = vpop.f32.mrf.mxu0
          %v2079 = vadd.f32 0.0, %v2078
          %2080 = vmatmul.f32.gmra.mxu0 %v1910
          %v2081 = vpop.f32.mrf.mxu0
          %v2082 = vadd.f32 0.0, %v2081
          %2083 = vmatmul.f32.gmra.mxu0 %v1913
          %v2084 = vpop.f32.mrf.mxu0
          %v2085 = vadd.f32 0.0, %v2084
          %2086 = vmatmul.f32.gmra.mxu0 %v1916
          %v2087 = vpop.f32.mrf.mxu0
          %v2088 = vadd.f32 0.0, %v2087
          %2089 = vmatmul.f32.gmra.mxu0 %v1919
          %v2090 = vpop.f32.mrf.mxu0
          %v2091 = vadd.f32 0.0, %v2090
          %2092 = vmatmul.f32.gmra.mxu0 %v1922
          %v2093 = vpop.f32.mrf.mxu0
          %v2094 = vadd.f32 0.0, %v2093
          %2095 = vdwg.mxu0
          %2096 = vmatpush.msra.mxu0 0.0
          %2097 = vmatpush.msra.mxu0 0.0
          %2098 = vmatpush.msra.mxu0 0.0
          %2099 = vmatpush.msra.mxu0 0.0
          %2100 = vmatpush.msra.mxu0 0.0
          %2101 = vmatpush.msra.mxu0 0.0
          %2102 = vmatpush.msra.mxu0 0.0
          %2103 = vmatpush.msra.mxu0 0.0
          %2104 = vmatpush.msra.mxu0 0.0
          %2105 = vmatpush.msra.mxu0 0.0
          %2106 = vmatpush.msra.mxu0 0.0
          %2107 = vmatpush.msra.mxu0 0.0
          %2108 = vmatpush.msra.mxu0 0.0
          %2109 = vmatpush.msra.mxu0 0.0
          %2110 = vmatpush.msra.mxu0 0.0
          %2111 = vmatpush.msra.mxu0 %v1457
          %2112 = vmatmul.f32.gmra.mxu0 %v1856
          %v2113 = vpop.f32.mrf.mxu0
          %v2114 = vadd.f32 0.0, %v2113
          %2115 = vmatmul.f32.gmra.mxu0 %v1859
          %v2116 = vpop.f32.mrf.mxu0
          %v2117 = vadd.f32 0.0, %v2116
          %2118 = vmatmul.f32.gmra.mxu0 %v1862
          %v2119 = vpop.f32.mrf.mxu0
          %v2120 = vadd.f32 0.0, %v2119
          %2121 = vmatmul.f32.gmra.mxu0 %v1865
          %v2122 = vpop.f32.mrf.mxu0
          %v2123 = vadd.f32 0.0, %v2122
          %2124 = vmatmul.f32.gmra.mxu0 %v1868
          %v2125 = vpop.f32.mrf.mxu0
          %v2126 = vadd.f32 0.0, %v2125
          %2127 = vmatmul.f32.gmra.mxu0 %v1871
          %v2128 = vpop.f32.mrf.mxu0
          %v2129 = vadd.f32 0.0, %v2128
          %2130 = vmatmul.f32.gmra.mxu0 %v1874
          %v2131 = vpop.f32.mrf.mxu0
          %v2132 = vadd.f32 0.0, %v2131
          %2133 = vmatmul.f32.gmra.mxu0 %v1877
          %v2134 = vpop.f32.mrf.mxu0
          %v2135 = vadd.f32 0.0, %v2134
          %2136 = vmatmul.f32.gmra.mxu0 %v1880
          %v2137 = vpop.f32.mrf.mxu0
          %v2138 = vadd.f32 0.0, %v2137
          %2139 = vmatmul.f32.gmra.mxu0 %v1883
          %v2140 = vpop.f32.mrf.mxu0
          %v2141 = vadd.f32 0.0, %v2140
          %2142 = vmatmul.f32.gmra.mxu0 %v1886
          %v2143 = vpop.f32.mrf.mxu0
          %v2144 = vadd.f32 0.0, %v2143
          %2145 = vmatmul.f32.gmra.mxu0 %v1889
          %v2146 = vpop.f32.mrf.mxu0
          %v2147 = vadd.f32 0.0, %v2146
          %2148 = vmatmul.f32.gmra.mxu0 %v1892
          %v2149 = vpop.f32.mrf.mxu0
          %v2150 = vadd.f32 0.0, %v2149
          %2151 = vmatmul.f32.gmra.mxu0 %v1895
          %v2152 = vpop.f32.mrf.mxu0
          %v2153 = vadd.f32 0.0, %v2152
          %2154 = vmatmul.f32.gmra.mxu0 %v1898
          %v2155 = vpop.f32.mrf.mxu0
          %v2156 = vadd.f32 0.0, %v2155
          %2157 = vmatmul.f32.gmra.mxu0 %v1901
          %v2158 = vpop.f32.mrf.mxu0
          %v2159 = vadd.f32 0.0, %v2158
          %2160 = vmatmul.f32.gmra.mxu0 %v1904
          %v2161 = vpop.f32.mrf.mxu0
          %v2162 = vadd.f32 0.0, %v2161
          %2163 = vmatmul.f32.gmra.mxu0 %v1907
          %v2164 = vpop.f32.mrf.mxu0
          %v2165 = vadd.f32 0.0, %v2164
          %2166 = vmatmul.f32.gmra.mxu0 %v1910
          %v2167 = vpop.f32.mrf.mxu0
          %v2168 = vadd.f32 0.0, %v2167
          %2169 = vmatmul.f32.gmra.mxu0 %v1913
          %v2170 = vpop.f32.mrf.mxu0
          %v2171 = vadd.f32 0.0, %v2170
          %2172 = vmatmul.f32.gmra.mxu0 %v1916
          %v2173 = vpop.f32.mrf.mxu0
          %v2174 = vadd.f32 0.0, %v2173
          %2175 = vmatmul.f32.gmra.mxu0 %v1919
          %v2176 = vpop.f32.mrf.mxu0
          %v2177 = vadd.f32 0.0, %v2176
          %2178 = vmatmul.f32.gmra.mxu0 %v1922
          %v2179 = vpop.f32.mrf.mxu0
          %v2180 = vadd.f32 0.0, %v2179
          %2181 = vdwg.mxu0
          %v2182 = vmul.f32 %v1786, 4.0
          %v2183 = vmul.f32 %v1787, 4.0
          %v2184 = vmul.f32 %v1788, 4.0
          %v2185 = vmul.f32 %v1789, 4.0
          %v2186 = vmul.f32 %v1790, 4.0
          %v2187 = vmul.f32 %v1791, 4.0
          %v2188 = vmul.f32 %v1792, 4.0
          %v2189 = vmul.f32 %v1793, 4.0
          %v2190 = vmul.f32 %v1794, 4.0
          %v2191 = vmul.f32 %v1795, 4.0
          %v2192 = vmul.f32 %v1796, 4.0
          %v2193 = vmul.f32 %v1797, 4.0
          %v2194 = vmul.f32 %v1798, 4.0
          %v2195 = vmul.f32 %v1799, 4.0
          %v2196 = vmul.f32 %v1800, 4.0
          %v2197 = vmul.f32 %v1801, 4.0
          %v2198 = vmul.f32 %v1802, 4.0
          %v2199 = vmul.f32 %v1803, 4.0
          %v2200 = vmul.f32 %v1804, 4.0
          %v2201 = vmul.f32 %v1805, 4.0
          %v2202 = vmul.f32 %v1806, 4.0
          %v2203 = vmul.f32 %v1807, 4.0
          %v2204 = vmul.f32 %v1808, 4.0
          %v2205 = vmul.f32 %v1809, 4.0
          %v2206 = vmul.f32 %v1810, 4.0
          %v2207 = vmul.f32 %v1811, 4.0
          %v2208 = vmul.f32 %v1812, 4.0
          %v2209 = vmul.f32 %v1813, 4.0
          %v2210 = vmul.f32 %v1814, 4.0
          %v2211 = vmul.f32 %v1815, 4.0
          %v2212 = vmul.f32 %v1816, 4.0
          %v2213 = vmul.f32 %v1817, 4.0
          %v2214 = vmul.f32 %v1818, 4.0
          %v2215 = vmul.f32 %v1819, 4.0
          %v2216 = vmul.f32 %v1820, 4.0
          %v2217 = vmul.f32 %v1821, 4.0
          %v2218 = vmul.f32 %v1822, 4.0
          %v2219 = vmul.f32 %v1823, 4.0
          %v2220 = vmul.f32 %v1824, 4.0
          %v2221 = vmul.f32 %v1825, 4.0
          %v2222 = vmul.f32 %v1826, 4.0
          %v2223 = vmul.f32 %v1827, 4.0
          %v2224 = vmul.f32 %v1828, 4.0
          %v2225 = vmul.f32 %v1829, 4.0
          %v2226 = vmul.f32 %v1830, 4.0
          %v2227 = vmul.f32 %v1831, 4.0
          %v2228 = vmul.f32 %v1832, 4.0
          %v2229 = vmul.f32 %v1833, 4.0
          %v2230 = vmul.f32 %v1834, 4.0
          %v2231 = vmul.f32 %v1835, 4.0
          %v2232 = vmul.f32 %v1836, 4.0
          %v2233 = vmul.f32 %v1837, 4.0
          %v2234 = vmul.f32 %v1838, 4.0
          %v2235 = vmul.f32 %v1839, 4.0
          %v2236 = vmul.f32 %v1840, 4.0
          %v2237 = vmul.f32 %v1841, 4.0
          %v2238 = vmul.f32 %v1842, 4.0
          %v2239 = vmul.f32 %v1843, 4.0
          %v2240 = vmul.f32 %v1844, 4.0
          %v2241 = vmul.f32 %v1845, 4.0
          %v2242 = vmul.f32 %v1846, 4.0
          %v2243 = vmul.f32 %v1847, 4.0
          %v2244 = vmul.f32 %v1848, 4.0
          %v2245 = vmul.f32 %v1849, 4.0
          %v2246 = vmul.f32 %v1850, 4.0
          %v2247 = vmul.f32 %v1851, 4.0
          %v2248 = vmul.f32 %v1852, 4.0
          %v2249 = vmul.f32 %v1853, 4.0
          %v2250 = vmul.f32 %v1854, 4.0
          %v2251 = vadd.f32 %v2182, 1.0
          %v2252 = vadd.f32 %v2183, 1.0
          %v2253 = vadd.f32 %v2184, 1.0
          %v2254 = vadd.f32 %v2185, 1.0
          %v2255 = vadd.f32 %v2186, 1.0
          %v2256 = vadd.f32 %v2187, 1.0
          %v2257 = vadd.f32 %v2188, 1.0
          %v2258 = vadd.f32 %v2189, 1.0
          %v2259 = vadd.f32 %v2190, 1.0
          %v2260 = vadd.f32 %v2191, 1.0
          %v2261 = vadd.f32 %v2192, 1.0
          %v2262 = vadd.f32 %v2193, 1.0
          %v2263 = vadd.f32 %v2194, 1.0
          %v2264 = vadd.f32 %v2195, 1.0
          %v2265 = vadd.f32 %v2196, 1.0
          %v2266 = vadd.f32 %v2197, 1.0
          %v2267 = vadd.f32 %v2198, 1.0
          %v2268 = vadd.f32 %v2199, 1.0
          %v2269 = vadd.f32 %v2200, 1.0
          %v2270 = vadd.f32 %v2201, 1.0
          %v2271 = vadd.f32 %v2202, 1.0
          %v2272 = vadd.f32 %v2203, 1.0
          %v2273 = vadd.f32 %v2204, 1.0
          %v2274 = vadd.f32 %v2205, 1.0
          %v2275 = vadd.f32 %v2206, 1.0
          %v2276 = vadd.f32 %v2207, 1.0
          %v2277 = vadd.f32 %v2208, 1.0
          %v2278 = vadd.f32 %v2209, 1.0
          %v2279 = vadd.f32 %v2210, 1.0
          %v2280 = vadd.f32 %v2211, 1.0
          %v2281 = vadd.f32 %v2212, 1.0
          %v2282 = vadd.f32 %v2213, 1.0
          %v2283 = vadd.f32 %v2214, 1.0
          %v2284 = vadd.f32 %v2215, 1.0
          %v2285 = vadd.f32 %v2216, 1.0
          %v2286 = vadd.f32 %v2217, 1.0
          %v2287 = vadd.f32 %v2218, 1.0
          %v2288 = vadd.f32 %v2219, 1.0
          %v2289 = vadd.f32 %v2220, 1.0
          %v2290 = vadd.f32 %v2221, 1.0
          %v2291 = vadd.f32 %v2222, 1.0
          %v2292 = vadd.f32 %v2223, 1.0
          %v2293 = vadd.f32 %v2224, 1.0
          %v2294 = vadd.f32 %v2225, 1.0
          %v2295 = vadd.f32 %v2226, 1.0
          %v2296 = vadd.f32 %v2227, 1.0
          %v2297 = vadd.f32 %v2228, 1.0
          %v2298 = vadd.f32 %v2229, 1.0
          %v2299 = vadd.f32 %v2230, 1.0
          %v2300 = vadd.f32 %v2231, 1.0
          %v2301 = vadd.f32 %v2232, 1.0
          %v2302 = vadd.f32 %v2233, 1.0
          %v2303 = vadd.f32 %v2234, 1.0
          %v2304 = vadd.f32 %v2235, 1.0
          %v2305 = vadd.f32 %v2236, 1.0
          %v2306 = vadd.f32 %v2237, 1.0
          %v2307 = vadd.f32 %v2238, 1.0
          %v2308 = vadd.f32 %v2239, 1.0
          %v2309 = vadd.f32 %v2240, 1.0
          %v2310 = vadd.f32 %v2241, 1.0
          %v2311 = vadd.f32 %v2242, 1.0
          %v2312 = vadd.f32 %v2243, 1.0
          %v2313 = vadd.f32 %v2244, 1.0
          %v2314 = vadd.f32 %v2245, 1.0
          %v2315 = vadd.f32 %v2246, 1.0
          %v2316 = vadd.f32 %v2247, 1.0
          %v2317 = vadd.f32 %v2248, 1.0
          %v2318 = vadd.f32 %v2249, 1.0
          %v2319 = vadd.f32 %v2250, 1.0
          %v2320 = vrcp.pop %v2251
          %v2321 = vrcp.pop %v2252
          %v2322 = vrcp.pop %v2253
          %v2323 = vrcp.pop %v2254
          %v2324 = vrcp.pop %v2255
          %v2325 = vrcp.pop %v2256
          %v2326 = vrcp.pop %v2257
          %v2327 = vrcp.pop %v2258
          %v2328 = vrcp.pop %v2259
          %v2329 = vrcp.pop %v2260
          %v2330 = vrcp.pop %v2261
          %v2331 = vrcp.pop %v2262
          %v2332 = vrcp.pop %v2263
          %v2333 = vrcp.pop %v2264
          %v2334 = vrcp.pop %v2265
          %v2335 = vrcp.pop %v2266
          %v2336 = vrcp.pop %v2267
          %v2337 = vrcp.pop %v2268
          %v2338 = vrcp.pop %v2269
          %v2339 = vrcp.pop %v2270
          %v2340 = vrcp.pop %v2271
          %v2341 = vrcp.pop %v2272
          %v2342 = vrcp.pop %v2273
          %v2343 = vrcp.pop %v2274
          %v2344 = vrcp.pop %v2275
          %v2345 = vrcp.pop %v2276
          %v2346 = vrcp.pop %v2277
          %v2347 = vrcp.pop %v2278
          %v2348 = vrcp.pop %v2279
          %v2349 = vrcp.pop %v2280
          %v2350 = vrcp.pop %v2281
          %v2351 = vrcp.pop %v2282
          %v2352 = vrcp.pop %v2283
          %v2353 = vrcp.pop %v2284
          %v2354 = vrcp.pop %v2285
          %v2355 = vrcp.pop %v2286
          %v2356 = vrcp.pop %v2287
          %v2357 = vrcp.pop %v2288
          %v2358 = vrcp.pop %v2289
          %v2359 = vrcp.pop %v2290
          %v2360 = vrcp.pop %v2291
          %v2361 = vrcp.pop %v2292
          %v2362 = vrcp.pop %v2293
          %v2363 = vrcp.pop %v2294
          %v2364 = vrcp.pop %v2295
          %v2365 = vrcp.pop %v2296
          %v2366 = vrcp.pop %v2297
          %v2367 = vrcp.pop %v2298
          %v2368 = vrcp.pop %v2299
          %v2369 = vrcp.pop %v2300
          %v2370 = vrcp.pop %v2301
          %v2371 = vrcp.pop %v2302
          %v2372 = vrcp.pop %v2303
          %v2373 = vrcp.pop %v2304
          %v2374 = vrcp.pop %v2305
          %v2375 = vrcp.pop %v2306
          %v2376 = vrcp.pop %v2307
          %v2377 = vrcp.pop %v2308
          %v2378 = vrcp.pop %v2309
          %v2379 = vrcp.pop %v2310
          %v2380 = vrcp.pop %v2311
          %v2381 = vrcp.pop %v2312
          %v2382 = vrcp.pop %v2313
          %v2383 = vrcp.pop %v2314
          %v2384 = vrcp.pop %v2315
          %v2385 = vrcp.pop %v2316
          %v2386 = vrcp.pop %v2317
          %v2387 = vrcp.pop %v2318
          %v2388 = vrcp.pop %v2319
          %v2389 = vmul.f32 %v2320, %v1942
          %v2390 = vmul.f32 %v2321, %v2028
          %v2391 = vmul.f32 %v2322, %v2114
          %v2392 = vmul.f32 %v2323, %v1945
          %v2393 = vmul.f32 %v2324, %v2031
          %v2394 = vmul.f32 %v2325, %v2117
          %v2395 = vmul.f32 %v2326, %v1948
          %v2396 = vmul.f32 %v2327, %v2034
          %v2397 = vmul.f32 %v2328, %v2120
          %v2398 = vmul.f32 %v2329, %v1951
          %v2399 = vmul.f32 %v2330, %v2037
          %v2400 = vmul.f32 %v2331, %v2123
          %v2401 = vmul.f32 %v2332, %v1954
          %v2402 = vmul.f32 %v2333, %v2040
          %v2403 = vmul.f32 %v2334, %v2126
          %v2404 = vmul.f32 %v2335, %v1957
          %v2405 = vmul.f32 %v2336, %v2043
          %v2406 = vmul.f32 %v2337, %v2129
          %v2407 = vmul.f32 %v2338, %v1960
          %v2408 = vmul.f32 %v2339, %v2046
          %v2409 = vmul.f32 %v2340, %v2132
          %v2410 = vmul.f32 %v2341, %v1963
          %v2411 = vmul.f32 %v2342, %v2049
          %v2412 = vmul.f32 %v2343, %v2135
          %v2413 = vmul.f32 %v2344, %v1966
          %v2414 = vmul.f32 %v2345, %v2052
          %v2415 = vmul.f32 %v2346, %v2138
          %v2416 = vmul.f32 %v2347, %v1969
          %v2417 = vmul.f32 %v2348, %v2055
          %v2418 = vmul.f32 %v2349, %v2141
          %v2419 = vmul.f32 %v2350, %v1972
          %v2420 = vmul.f32 %v2351, %v2058
          %v2421 = vmul.f32 %v2352, %v2144
          %v2422 = vmul.f32 %v2353, %v1975
          %v2423 = vmul.f32 %v2354, %v2061
          %v2424 = vmul.f32 %v2355, %v2147
          %v2425 = vmul.f32 %v2356, %v1978
          %v2426 = vmul.f32 %v2357, %v2064
          %v2427 = vmul.f32 %v2358, %v2150
          %v2428 = vmul.f32 %v2359, %v1981
          %v2429 = vmul.f32 %v2360, %v2067
          %v2430 = vmul.f32 %v2361, %v2153
          %v2431 = vmul.f32 %v2362, %v1984
          %v2432 = vmul.f32 %v2363, %v2070
          %v2433 = vmul.f32 %v2364, %v2156
          %v2434 = vmul.f32 %v2365, %v1987
          %v2435 = vmul.f32 %v2366, %v2073
          %v2436 = vmul.f32 %v2367, %v2159
          %v2437 = vmul.f32 %v2368, %v1990
          %v2438 = vmul.f32 %v2369, %v2076
          %v2439 = vmul.f32 %v2370, %v2162
          %v2440 = vmul.f32 %v2371, %v1993
          %v2441 = vmul.f32 %v2372, %v2079
          %v2442 = vmul.f32 %v2373, %v2165
          %v2443 = vmul.f32 %v2374, %v1996
          %v2444 = vmul.f32 %v2375, %v2082
          %v2445 = vmul.f32 %v2376, %v2168
          %v2446 = vmul.f32 %v2377, %v1999
          %v2447 = vmul.f32 %v2378, %v2085
          %v2448 = vmul.f32 %v2379, %v2171
          %v2449 = vmul.f32 %v2380, %v2002
          %v2450 = vmul.f32 %v2381, %v2088
          %v2451 = vmul.f32 %v2382, %v2174
          %v2452 = vmul.f32 %v2383, %v2005
          %v2453 = vmul.f32 %v2384, %v2091
          %v2454 = vmul.f32 %v2385, %v2177
          %v2455 = vmul.f32 %v2386, %v2008
          %v2456 = vmul.f32 %v2387, %v2094
          %v2457 = vmul.f32 %v2388, %v2180
          %v2458 = vlaneseq
          %v2459 = vshrl.u32 %v2458, 7
          %v2460 = vadd.s32 %v2459, 8
          %v2461 = vadd.s32 %v2459, 16
          %v2462 = vadd.s32 %v2459, 24
          %v2463 = vadd.s32 %v2459, 32
          %v2464 = vadd.s32 %v2459, 40
          %v2465 = vadd.s32 %v2459, 48
          %v2466 = vadd.s32 %v2459, 56
          %v2467 = vadd.s32 %v2459, 64
          %v2468 = vadd.s32 %v2459, 72
          %v2469 = vadd.s32 %v2459, 80
          %v2470 = vadd.s32 %v2459, 88
          %v2471 = vadd.s32 %v2459, 96
          %v2472 = vadd.s32 %v2459, 104
          %v2473 = vadd.s32 %v2459, 112
          %v2474 = vadd.s32 %v2459, 120
          %v2475 = vadd.s32 %v2459, 128
          %v2476 = vadd.s32 %v2459, 136
          %v2477 = vadd.s32 %v2459, 144
          %v2478 = vadd.s32 %v2459, 152
          %v2479 = vadd.s32 %v2459, 160
          %v2480 = vadd.s32 %v2459, 168
          %v2481 = vadd.s32 %v2459, 176
          %v2482 = vstv %s227
          %v2483 = vadd.s32 %v2459, %v2482
          %v2484 = vadd.s32 %v2460, %v2482
          %v2485 = vadd.s32 %v2461, %v2482
          %v2486 = vadd.s32 %v2462, %v2482
          %v2487 = vadd.s32 %v2463, %v2482
          %v2488 = vadd.s32 %v2464, %v2482
          %v2489 = vadd.s32 %v2465, %v2482
          %v2490 = vadd.s32 %v2466, %v2482
          %v2491 = vadd.s32 %v2467, %v2482
          %v2492 = vadd.s32 %v2468, %v2482
          %v2493 = vadd.s32 %v2469, %v2482
          %v2494 = vadd.s32 %v2470, %v2482
          %v2495 = vadd.s32 %v2471, %v2482
          %v2496 = vadd.s32 %v2472, %v2482
          %v2497 = vadd.s32 %v2473, %v2482
          %v2498 = vadd.s32 %v2474, %v2482
          %v2499 = vadd.s32 %v2475, %v2482
          %v2500 = vadd.s32 %v2476, %v2482
          %v2501 = vadd.s32 %v2477, %v2482
          %v2502 = vadd.s32 %v2478, %v2482
          %v2503 = vadd.s32 %v2479, %v2482
          %v2504 = vadd.s32 %v2480, %v2482
          %v2505 = vadd.s32 %v2481, %v2482
          %v2506 = vlaneseq
          %v2507 = vand.u32 %v2506, 127
          %v2508 = vadd.s32 %v2507, 128
          %v2509 = vadd.s32 %v2507, 256
          %s2510 = sadd.s32 %s228, 0
          %v2511 = vstv %s2510
          %v2512 = vadd.s32 %v2507, %v2511
          %v2513 = vadd.s32 %v2508, %v2511
          %v2514 = vadd.s32 %v2509, %v2511
          %v2515 = vsub.s32 %v2512, %v2483
          %v2516 = vsub.s32 %v2513, %v2483
          %v2517 = vsub.s32 %v2514, %v2483
          %v2518 = vsub.s32 %v2512, %v2484
          %v2519 = vsub.s32 %v2513, %v2484
          %v2520 = vsub.s32 %v2514, %v2484
          %v2521 = vsub.s32 %v2512, %v2485
          %v2522 = vsub.s32 %v2513, %v2485
          %v2523 = vsub.s32 %v2514, %v2485
          %v2524 = vsub.s32 %v2512, %v2486
          %v2525 = vsub.s32 %v2513, %v2486
          %v2526 = vsub.s32 %v2514, %v2486
          %v2527 = vsub.s32 %v2512, %v2487
          %v2528 = vsub.s32 %v2513, %v2487
          %v2529 = vsub.s32 %v2514, %v2487
          %v2530 = vsub.s32 %v2512, %v2488
          %v2531 = vsub.s32 %v2513, %v2488
          %v2532 = vsub.s32 %v2514, %v2488
          %v2533 = vsub.s32 %v2512, %v2489
          %v2534 = vsub.s32 %v2513, %v2489
          %v2535 = vsub.s32 %v2514, %v2489
          %v2536 = vsub.s32 %v2512, %v2490
          %v2537 = vsub.s32 %v2513, %v2490
          %v2538 = vsub.s32 %v2514, %v2490
          %v2539 = vsub.s32 %v2512, %v2491
          %v2540 = vsub.s32 %v2513, %v2491
          %v2541 = vsub.s32 %v2514, %v2491
          %v2542 = vsub.s32 %v2512, %v2492
          %v2543 = vsub.s32 %v2513, %v2492
          %v2544 = vsub.s32 %v2514, %v2492
          %v2545 = vsub.s32 %v2512, %v2493
          %v2546 = vsub.s32 %v2513, %v2493
          %v2547 = vsub.s32 %v2514, %v2493
          %v2548 = vsub.s32 %v2512, %v2494
          %v2549 = vsub.s32 %v2513, %v2494
          %v2550 = vsub.s32 %v2514, %v2494
          %v2551 = vsub.s32 %v2512, %v2495
          %v2552 = vsub.s32 %v2513, %v2495
          %v2553 = vsub.s32 %v2514, %v2495
          %v2554 = vsub.s32 %v2512, %v2496
          %v2555 = vsub.s32 %v2513, %v2496
          %v2556 = vsub.s32 %v2514, %v2496
          %v2557 = vsub.s32 %v2512, %v2497
          %v2558 = vsub.s32 %v2513, %v2497
          %v2559 = vsub.s32 %v2514, %v2497
          %v2560 = vsub.s32 %v2512, %v2498
          %v2561 = vsub.s32 %v2513, %v2498
          %v2562 = vsub.s32 %v2514, %v2498
          %v2563 = vsub.s32 %v2512, %v2499
          %v2564 = vsub.s32 %v2513, %v2499
          %v2565 = vsub.s32 %v2514, %v2499
          %v2566 = vsub.s32 %v2512, %v2500
          %v2567 = vsub.s32 %v2513, %v2500
          %v2568 = vsub.s32 %v2514, %v2500
          %v2569 = vsub.s32 %v2512, %v2501
          %v2570 = vsub.s32 %v2513, %v2501
          %v2571 = vsub.s32 %v2514, %v2501
          %v2572 = vsub.s32 %v2512, %v2502
          %v2573 = vsub.s32 %v2513, %v2502
          %v2574 = vsub.s32 %v2514, %v2502
          %v2575 = vsub.s32 %v2512, %v2503
          %v2576 = vsub.s32 %v2513, %v2503
          %v2577 = vsub.s32 %v2514, %v2503
          %v2578 = vsub.s32 %v2512, %v2504
          %v2579 = vsub.s32 %v2513, %v2504
          %v2580 = vsub.s32 %v2514, %v2504
          %v2581 = vsub.s32 %v2512, %v2505
          %v2582 = vsub.s32 %v2513, %v2505
          %v2583 = vsub.s32 %v2514, %v2505
          %vm2584 = vcmp.gt.s32.totalorder %v2515, 0
          %vm2585 = vcmp.gt.s32.totalorder %v2516, 0
          %vm2586 = vcmp.gt.s32.totalorder %v2517, 0
          %vm2587 = vcmp.gt.s32.totalorder %v2518, 0
          %vm2588 = vcmp.gt.s32.totalorder %v2519, 0
          %vm2589 = vcmp.gt.s32.totalorder %v2520, 0
          %vm2590 = vcmp.gt.s32.totalorder %v2521, 0
          %vm2591 = vcmp.gt.s32.totalorder %v2522, 0
          %vm2592 = vcmp.gt.s32.totalorder %v2523, 0
          %vm2593 = vcmp.gt.s32.totalorder %v2524, 0
          %vm2594 = vcmp.gt.s32.totalorder %v2525, 0
          %vm2595 = vcmp.gt.s32.totalorder %v2526, 0
          %vm2596 = vcmp.gt.s32.totalorder %v2527, 0
          %vm2597 = vcmp.gt.s32.totalorder %v2528, 0
          %vm2598 = vcmp.gt.s32.totalorder %v2529, 0
          %vm2599 = vcmp.gt.s32.totalorder %v2530, 0
          %vm2600 = vcmp.gt.s32.totalorder %v2531, 0
          %vm2601 = vcmp.gt.s32.totalorder %v2532, 0
          %vm2602 = vcmp.gt.s32.totalorder %v2533, 0
          %vm2603 = vcmp.gt.s32.totalorder %v2534, 0
          %vm2604 = vcmp.gt.s32.totalorder %v2535, 0
          %vm2605 = vcmp.gt.s32.totalorder %v2536, 0
          %vm2606 = vcmp.gt.s32.totalorder %v2537, 0
          %vm2607 = vcmp.gt.s32.totalorder %v2538, 0
          %vm2608 = vcmp.gt.s32.totalorder %v2539, 0
          %vm2609 = vcmp.gt.s32.totalorder %v2540, 0
          %vm2610 = vcmp.gt.s32.totalorder %v2541, 0
          %vm2611 = vcmp.gt.s32.totalorder %v2542, 0
          %vm2612 = vcmp.gt.s32.totalorder %v2543, 0
          %vm2613 = vcmp.gt.s32.totalorder %v2544, 0
          %vm2614 = vcmp.gt.s32.totalorder %v2545, 0
          %vm2615 = vcmp.gt.s32.totalorder %v2546, 0
          %vm2616 = vcmp.gt.s32.totalorder %v2547, 0
          %vm2617 = vcmp.gt.s32.totalorder %v2548, 0
          %vm2618 = vcmp.gt.s32.totalorder %v2549, 0
          %vm2619 = vcmp.gt.s32.totalorder %v2550, 0
          %vm2620 = vcmp.gt.s32.totalorder %v2551, 0
          %vm2621 = vcmp.gt.s32.totalorder %v2552, 0
          %vm2622 = vcmp.gt.s32.totalorder %v2553, 0
          %vm2623 = vcmp.gt.s32.totalorder %v2554, 0
          %vm2624 = vcmp.gt.s32.totalorder %v2555, 0
          %vm2625 = vcmp.gt.s32.totalorder %v2556, 0
          %vm2626 = vcmp.gt.s32.totalorder %v2557, 0
          %vm2627 = vcmp.gt.s32.totalorder %v2558, 0
          %vm2628 = vcmp.gt.s32.totalorder %v2559, 0
          %vm2629 = vcmp.gt.s32.totalorder %v2560, 0
          %vm2630 = vcmp.gt.s32.totalorder %v2561, 0
          %vm2631 = vcmp.gt.s32.totalorder %v2562, 0
          %vm2632 = vcmp.gt.s32.totalorder %v2563, 0
          %vm2633 = vcmp.gt.s32.totalorder %v2564, 0
          %vm2634 = vcmp.gt.s32.totalorder %v2565, 0
          %vm2635 = vcmp.gt.s32.totalorder %v2566, 0
          %vm2636 = vcmp.gt.s32.totalorder %v2567, 0
          %vm2637 = vcmp.gt.s32.totalorder %v2568, 0
          %vm2638 = vcmp.gt.s32.totalorder %v2569, 0
          %vm2639 = vcmp.gt.s32.totalorder %v2570, 0
          %vm2640 = vcmp.gt.s32.totalorder %v2571, 0
          %vm2641 = vcmp.gt.s32.totalorder %v2572, 0
          %vm2642 = vcmp.gt.s32.totalorder %v2573, 0
          %vm2643 = vcmp.gt.s32.totalorder %v2574, 0
          %vm2644 = vcmp.gt.s32.totalorder %v2575, 0
          %vm2645 = vcmp.gt.s32.totalorder %v2576, 0
          %vm2646 = vcmp.gt.s32.totalorder %v2577, 0
          %vm2647 = vcmp.gt.s32.totalorder %v2578, 0
          %vm2648 = vcmp.gt.s32.totalorder %v2579, 0
          %vm2649 = vcmp.gt.s32.totalorder %v2580, 0
          %vm2650 = vcmp.gt.s32.totalorder %v2581, 0
          %vm2651 = vcmp.gt.s32.totalorder %v2582, 0
          %vm2652 = vcmp.gt.s32.totalorder %v2583, 0
          %vm2653 = vcmp.eq.s32.totalorder %v2515, 0
          %vm2654 = vcmp.eq.s32.totalorder %v2516, 0
          %vm2655 = vcmp.eq.s32.totalorder %v2517, 0
          %vm2656 = vcmp.eq.s32.totalorder %v2518, 0
          %vm2657 = vcmp.eq.s32.totalorder %v2519, 0
          %vm2658 = vcmp.eq.s32.totalorder %v2520, 0
          %vm2659 = vcmp.eq.s32.totalorder %v2521, 0
          %vm2660 = vcmp.eq.s32.totalorder %v2522, 0
          %vm2661 = vcmp.eq.s32.totalorder %v2523, 0
          %vm2662 = vcmp.eq.s32.totalorder %v2524, 0
          %vm2663 = vcmp.eq.s32.totalorder %v2525, 0
          %vm2664 = vcmp.eq.s32.totalorder %v2526, 0
          %vm2665 = vcmp.eq.s32.totalorder %v2527, 0
          %vm2666 = vcmp.eq.s32.totalorder %v2528, 0
          %vm2667 = vcmp.eq.s32.totalorder %v2529, 0
          %vm2668 = vcmp.eq.s32.totalorder %v2530, 0
          %vm2669 = vcmp.eq.s32.totalorder %v2531, 0
          %vm2670 = vcmp.eq.s32.totalorder %v2532, 0
          %vm2671 = vcmp.eq.s32.totalorder %v2533, 0
          %vm2672 = vcmp.eq.s32.totalorder %v2534, 0
          %vm2673 = vcmp.eq.s32.totalorder %v2535, 0
          %vm2674 = vcmp.eq.s32.totalorder %v2536, 0
          %vm2675 = vcmp.eq.s32.totalorder %v2537, 0
          %vm2676 = vcmp.eq.s32.totalorder %v2538, 0
          %vm2677 = vcmp.eq.s32.totalorder %v2539, 0
          %vm2678 = vcmp.eq.s32.totalorder %v2540, 0
          %vm2679 = vcmp.eq.s32.totalorder %v2541, 0
          %vm2680 = vcmp.eq.s32.totalorder %v2542, 0
          %vm2681 = vcmp.eq.s32.totalorder %v2543, 0
          %vm2682 = vcmp.eq.s32.totalorder %v2544, 0
          %vm2683 = vcmp.eq.s32.totalorder %v2545, 0
          %vm2684 = vcmp.eq.s32.totalorder %v2546, 0
          %vm2685 = vcmp.eq.s32.totalorder %v2547, 0
          %vm2686 = vcmp.eq.s32.totalorder %v2548, 0
          %vm2687 = vcmp.eq.s32.totalorder %v2549, 0
          %vm2688 = vcmp.eq.s32.totalorder %v2550, 0
          %vm2689 = vcmp.eq.s32.totalorder %v2551, 0
          %vm2690 = vcmp.eq.s32.totalorder %v2552, 0
          %vm2691 = vcmp.eq.s32.totalorder %v2553, 0
          %vm2692 = vcmp.eq.s32.totalorder %v2554, 0
          %vm2693 = vcmp.eq.s32.totalorder %v2555, 0
          %vm2694 = vcmp.eq.s32.totalorder %v2556, 0
          %vm2695 = vcmp.eq.s32.totalorder %v2557, 0
          %vm2696 = vcmp.eq.s32.totalorder %v2558, 0
          %vm2697 = vcmp.eq.s32.totalorder %v2559, 0
          %vm2698 = vcmp.eq.s32.totalorder %v2560, 0
          %vm2699 = vcmp.eq.s32.totalorder %v2561, 0
          %vm2700 = vcmp.eq.s32.totalorder %v2562, 0
          %vm2701 = vcmp.eq.s32.totalorder %v2563, 0
          %vm2702 = vcmp.eq.s32.totalorder %v2564, 0
          %vm2703 = vcmp.eq.s32.totalorder %v2565, 0
          %vm2704 = vcmp.eq.s32.totalorder %v2566, 0
          %vm2705 = vcmp.eq.s32.totalorder %v2567, 0
          %vm2706 = vcmp.eq.s32.totalorder %v2568, 0
          %vm2707 = vcmp.eq.s32.totalorder %v2569, 0
          %vm2708 = vcmp.eq.s32.totalorder %v2570, 0
          %vm2709 = vcmp.eq.s32.totalorder %v2571, 0
          %vm2710 = vcmp.eq.s32.totalorder %v2572, 0
          %vm2711 = vcmp.eq.s32.totalorder %v2573, 0
          %vm2712 = vcmp.eq.s32.totalorder %v2574, 0
          %vm2713 = vcmp.eq.s32.totalorder %v2575, 0
          %vm2714 = vcmp.eq.s32.totalorder %v2576, 0
          %vm2715 = vcmp.eq.s32.totalorder %v2577, 0
          %vm2716 = vcmp.eq.s32.totalorder %v2578, 0
          %vm2717 = vcmp.eq.s32.totalorder %v2579, 0
          %vm2718 = vcmp.eq.s32.totalorder %v2580, 0
          %vm2719 = vcmp.eq.s32.totalorder %v2581, 0
          %vm2720 = vcmp.eq.s32.totalorder %v2582, 0
          %vm2721 = vcmp.eq.s32.totalorder %v2583, 0
          %v2722 = vsel %vm2653, 1.0, 0.0
          %v2723 = vsel %vm2654, 1.0, 0.0
          %v2724 = vsel %vm2655, 1.0, 0.0
          %v2725 = vsel %vm2656, 1.0, 0.0
          %v2726 = vsel %vm2657, 1.0, 0.0
          %v2727 = vsel %vm2658, 1.0, 0.0
          %v2728 = vsel %vm2659, 1.0, 0.0
          %v2729 = vsel %vm2660, 1.0, 0.0
          %v2730 = vsel %vm2661, 1.0, 0.0
          %v2731 = vsel %vm2662, 1.0, 0.0
          %v2732 = vsel %vm2663, 1.0, 0.0
          %v2733 = vsel %vm2664, 1.0, 0.0
          %v2734 = vsel %vm2665, 1.0, 0.0
          %v2735 = vsel %vm2666, 1.0, 0.0
          %v2736 = vsel %vm2667, 1.0, 0.0
          %v2737 = vsel %vm2668, 1.0, 0.0
          %v2738 = vsel %vm2669, 1.0, 0.0
          %v2739 = vsel %vm2670, 1.0, 0.0
          %v2740 = vsel %vm2671, 1.0, 0.0
          %v2741 = vsel %vm2672, 1.0, 0.0
          %v2742 = vsel %vm2673, 1.0, 0.0
          %v2743 = vsel %vm2674, 1.0, 0.0
          %v2744 = vsel %vm2675, 1.0, 0.0
          %v2745 = vsel %vm2676, 1.0, 0.0
          %v2746 = vsel %vm2677, 1.0, 0.0
          %v2747 = vsel %vm2678, 1.0, 0.0
          %v2748 = vsel %vm2679, 1.0, 0.0
          %v2749 = vsel %vm2680, 1.0, 0.0
          %v2750 = vsel %vm2681, 1.0, 0.0
          %v2751 = vsel %vm2682, 1.0, 0.0
          %v2752 = vsel %vm2683, 1.0, 0.0
          %v2753 = vsel %vm2684, 1.0, 0.0
          %v2754 = vsel %vm2685, 1.0, 0.0
          %v2755 = vsel %vm2686, 1.0, 0.0
          %v2756 = vsel %vm2687, 1.0, 0.0
          %v2757 = vsel %vm2688, 1.0, 0.0
          %v2758 = vsel %vm2689, 1.0, 0.0
          %v2759 = vsel %vm2690, 1.0, 0.0
          %v2760 = vsel %vm2691, 1.0, 0.0
          %v2761 = vsel %vm2692, 1.0, 0.0
          %v2762 = vsel %vm2693, 1.0, 0.0
          %v2763 = vsel %vm2694, 1.0, 0.0
          %v2764 = vsel %vm2695, 1.0, 0.0
          %v2765 = vsel %vm2696, 1.0, 0.0
          %v2766 = vsel %vm2697, 1.0, 0.0
          %v2767 = vsel %vm2698, 1.0, 0.0
          %v2768 = vsel %vm2699, 1.0, 0.0
          %v2769 = vsel %vm2700, 1.0, 0.0
          %v2770 = vsel %vm2701, 1.0, 0.0
          %v2771 = vsel %vm2702, 1.0, 0.0
          %v2772 = vsel %vm2703, 1.0, 0.0
          %v2773 = vsel %vm2704, 1.0, 0.0
          %v2774 = vsel %vm2705, 1.0, 0.0
          %v2775 = vsel %vm2706, 1.0, 0.0
          %v2776 = vsel %vm2707, 1.0, 0.0
          %v2777 = vsel %vm2708, 1.0, 0.0
          %v2778 = vsel %vm2709, 1.0, 0.0
          %v2779 = vsel %vm2710, 1.0, 0.0
          %v2780 = vsel %vm2711, 1.0, 0.0
          %v2781 = vsel %vm2712, 1.0, 0.0
          %v2782 = vsel %vm2713, 1.0, 0.0
          %v2783 = vsel %vm2714, 1.0, 0.0
          %v2784 = vsel %vm2715, 1.0, 0.0
          %v2785 = vsel %vm2716, 1.0, 0.0
          %v2786 = vsel %vm2717, 1.0, 0.0
          %v2787 = vsel %vm2718, 1.0, 0.0
          %v2788 = vsel %vm2719, 1.0, 0.0
          %v2789 = vsel %vm2720, 1.0, 0.0
          %v2790 = vsel %vm2721, 1.0, 0.0
          %v2791 = vsel %vm2584, 2.0, %v2722
          %v2792 = vsel %vm2585, 2.0, %v2723
          %v2793 = vsel %vm2586, 2.0, %v2724
          %v2794 = vsel %vm2587, 2.0, %v2725
          %v2795 = vsel %vm2588, 2.0, %v2726
          %v2796 = vsel %vm2589, 2.0, %v2727
          %v2797 = vsel %vm2590, 2.0, %v2728
          %v2798 = vsel %vm2591, 2.0, %v2729
          %v2799 = vsel %vm2592, 2.0, %v2730
          %v2800 = vsel %vm2593, 2.0, %v2731
          %v2801 = vsel %vm2594, 2.0, %v2732
          %v2802 = vsel %vm2595, 2.0, %v2733
          %v2803 = vsel %vm2596, 2.0, %v2734
          %v2804 = vsel %vm2597, 2.0, %v2735
          %v2805 = vsel %vm2598, 2.0, %v2736
          %v2806 = vsel %vm2599, 2.0, %v2737
          %v2807 = vsel %vm2600, 2.0, %v2738
          %v2808 = vsel %vm2601, 2.0, %v2739
          %v2809 = vsel %vm2602, 2.0, %v2740
          %v2810 = vsel %vm2603, 2.0, %v2741
          %v2811 = vsel %vm2604, 2.0, %v2742
          %v2812 = vsel %vm2605, 2.0, %v2743
          %v2813 = vsel %vm2606, 2.0, %v2744
          %v2814 = vsel %vm2607, 2.0, %v2745
          %v2815 = vsel %vm2608, 2.0, %v2746
          %v2816 = vsel %vm2609, 2.0, %v2747
          %v2817 = vsel %vm2610, 2.0, %v2748
          %v2818 = vsel %vm2611, 2.0, %v2749
          %v2819 = vsel %vm2612, 2.0, %v2750
          %v2820 = vsel %vm2613, 2.0, %v2751
          %v2821 = vsel %vm2614, 2.0, %v2752
          %v2822 = vsel %vm2615, 2.0, %v2753
          %v2823 = vsel %vm2616, 2.0, %v2754
          %v2824 = vsel %vm2617, 2.0, %v2755
          %v2825 = vsel %vm2618, 2.0, %v2756
          %v2826 = vsel %vm2619, 2.0, %v2757
          %v2827 = vsel %vm2620, 2.0, %v2758
          %v2828 = vsel %vm2621, 2.0, %v2759
          %v2829 = vsel %vm2622, 2.0, %v2760
          %v2830 = vsel %vm2623, 2.0, %v2761
          %v2831 = vsel %vm2624, 2.0, %v2762
          %v2832 = vsel %vm2625, 2.0, %v2763
          %v2833 = vsel %vm2626, 2.0, %v2764
          %v2834 = vsel %vm2627, 2.0, %v2765
          %v2835 = vsel %vm2628, 2.0, %v2766
          %v2836 = vsel %vm2629, 2.0, %v2767
          %v2837 = vsel %vm2630, 2.0, %v2768
          %v2838 = vsel %vm2631, 2.0, %v2769
          %v2839 = vsel %vm2632, 2.0, %v2770
          %v2840 = vsel %vm2633, 2.0, %v2771
          %v2841 = vsel %vm2634, 2.0, %v2772
          %v2842 = vsel %vm2635, 2.0, %v2773
          %v2843 = vsel %vm2636, 2.0, %v2774
          %v2844 = vsel %vm2637, 2.0, %v2775
          %v2845 = vsel %vm2638, 2.0, %v2776
          %v2846 = vsel %vm2639, 2.0, %v2777
          %v2847 = vsel %vm2640, 2.0, %v2778
          %v2848 = vsel %vm2641, 2.0, %v2779
          %v2849 = vsel %vm2642, 2.0, %v2780
          %v2850 = vsel %vm2643, 2.0, %v2781
          %v2851 = vsel %vm2644, 2.0, %v2782
          %v2852 = vsel %vm2645, 2.0, %v2783
          %v2853 = vsel %vm2646, 2.0, %v2784
          %v2854 = vsel %vm2647, 2.0, %v2785
          %v2855 = vsel %vm2648, 2.0, %v2786
          %v2856 = vsel %vm2649, 2.0, %v2787
          %v2857 = vsel %vm2650, 2.0, %v2788
          %v2858 = vsel %vm2651, 2.0, %v2789
          %v2859 = vsel %vm2652, 2.0, %v2790
          %v2860 = vmul.f32 %v2389, %v2791
          %v2861 = vmul.f32 %v2390, %v2792
          %v2862 = vmul.f32 %v2391, %v2793
          %v2863 = vmul.f32 %v2392, %v2794
          %v2864 = vmul.f32 %v2393, %v2795
          %v2865 = vmul.f32 %v2394, %v2796
          %v2866 = vmul.f32 %v2395, %v2797
          %v2867 = vmul.f32 %v2396, %v2798
          %v2868 = vmul.f32 %v2397, %v2799
          %v2869 = vmul.f32 %v2398, %v2800
          %v2870 = vmul.f32 %v2399, %v2801
          %v2871 = vmul.f32 %v2400, %v2802
          %v2872 = vmul.f32 %v2401, %v2803
          %v2873 = vmul.f32 %v2402, %v2804
          %v2874 = vmul.f32 %v2403, %v2805
          %v2875 = vmul.f32 %v2404, %v2806
          %v2876 = vmul.f32 %v2405, %v2807
          %v2877 = vmul.f32 %v2406, %v2808
          %v2878 = vmul.f32 %v2407, %v2809
          %v2879 = vmul.f32 %v2408, %v2810
          %v2880 = vmul.f32 %v2409, %v2811
          %v2881 = vmul.f32 %v2410, %v2812
          %v2882 = vmul.f32 %v2411, %v2813
          %v2883 = vmul.f32 %v2412, %v2814
          %v2884 = vmul.f32 %v2413, %v2815
          %v2885 = vmul.f32 %v2414, %v2816
          %v2886 = vmul.f32 %v2415, %v2817
          %v2887 = vmul.f32 %v2416, %v2818
          %v2888 = vmul.f32 %v2417, %v2819
          %v2889 = vmul.f32 %v2418, %v2820
          %v2890 = vmul.f32 %v2419, %v2821
          %v2891 = vmul.f32 %v2420, %v2822
          %v2892 = vmul.f32 %v2421, %v2823
          %v2893 = vmul.f32 %v2422, %v2824
          %v2894 = vmul.f32 %v2423, %v2825
          %v2895 = vmul.f32 %v2424, %v2826
          %v2896 = vmul.f32 %v2425, %v2827
          %v2897 = vmul.f32 %v2426, %v2828
          %v2898 = vmul.f32 %v2427, %v2829
          %v2899 = vmul.f32 %v2428, %v2830
          %v2900 = vmul.f32 %v2429, %v2831
          %v2901 = vmul.f32 %v2430, %v2832
          %v2902 = vmul.f32 %v2431, %v2833
          %v2903 = vmul.f32 %v2432, %v2834
          %v2904 = vmul.f32 %v2433, %v2835
          %v2905 = vmul.f32 %v2434, %v2836
          %v2906 = vmul.f32 %v2435, %v2837
          %v2907 = vmul.f32 %v2436, %v2838
          %v2908 = vmul.f32 %v2437, %v2839
          %v2909 = vmul.f32 %v2438, %v2840
          %v2910 = vmul.f32 %v2439, %v2841
          %v2911 = vmul.f32 %v2440, %v2842
          %v2912 = vmul.f32 %v2441, %v2843
          %v2913 = vmul.f32 %v2442, %v2844
          %v2914 = vmul.f32 %v2443, %v2845
          %v2915 = vmul.f32 %v2444, %v2846
          %v2916 = vmul.f32 %v2445, %v2847
          %v2917 = vmul.f32 %v2446, %v2848
          %v2918 = vmul.f32 %v2447, %v2849
          %v2919 = vmul.f32 %v2448, %v2850
          %v2920 = vmul.f32 %v2449, %v2851
          %v2921 = vmul.f32 %v2450, %v2852
          %v2922 = vmul.f32 %v2451, %v2853
          %v2923 = vmul.f32 %v2452, %v2854
          %v2924 = vmul.f32 %v2453, %v2855
          %v2925 = vmul.f32 %v2454, %v2856
          %v2926 = vmul.f32 %v2455, %v2857
          %v2927 = vmul.f32 %v2456, %v2858
          %v2928 = vmul.f32 %v2457, %v2859
          %v2929 = vadd.f32 %v2860, %v2863
          %v2930 = vadd.f32 %v2929, %v2866
          %v2931 = vadd.f32 %v2930, %v2869
          %v2932 = vadd.f32 %v2931, %v2872
          %v2933 = vadd.f32 %v2932, %v2875
          %v2934 = vadd.f32 %v2933, %v2878
          %v2935 = vadd.f32 %v2934, %v2881
          %v2936 = vadd.f32 %v2935, %v2884
          %v2937 = vadd.f32 %v2936, %v2887
          %v2938 = vadd.f32 %v2937, %v2890
          %v2939 = vadd.f32 %v2938, %v2893
          %v2940 = vadd.f32 %v2939, %v2896
          %v2941 = vadd.f32 %v2940, %v2899
          %v2942 = vadd.f32 %v2941, %v2902
          %v2943 = vadd.f32 %v2942, %v2905
          %v2944 = vadd.f32 %v2943, %v2908
          %v2945 = vadd.f32 %v2944, %v2911
          %v2946 = vadd.f32 %v2945, %v2914
          %v2947 = vadd.f32 %v2946, %v2917
          %v2948 = vadd.f32 %v2947, %v2920
          %v2949 = vadd.f32 %v2948, %v2923
          %v2950 = vadd.f32 %v2949, %v2926
          %v2951 = vrot.slane %v2950, 4
          %v2952 = vadd.f32 %v2950, %v2951
          %v2953 = vrot.slane %v2952, 2
          %v2954 = vadd.f32 %v2952, %v2953
          %v2955 = vrot.slane %v2954, 1
          %v2956 = vadd.f32 %v2954, %v2955
          %v2957 = vadd.f32 %v2861, %v2864
          %v2958 = vadd.f32 %v2957, %v2867
          %v2959 = vadd.f32 %v2958, %v2870
          %v2960 = vadd.f32 %v2959, %v2873
          %v2961 = vadd.f32 %v2960, %v2876
          %v2962 = vadd.f32 %v2961, %v2879
          %v2963 = vadd.f32 %v2962, %v2882
          %v2964 = vadd.f32 %v2963, %v2885
          %v2965 = vadd.f32 %v2964, %v2888
          %v2966 = vadd.f32 %v2965, %v2891
          %v2967 = vadd.f32 %v2966, %v2894
          %v2968 = vadd.f32 %v2967, %v2897
          %v2969 = vadd.f32 %v2968, %v2900
          %v2970 = vadd.f32 %v2969, %v2903
          %v2971 = vadd.f32 %v2970, %v2906
          %v2972 = vadd.f32 %v2971, %v2909
          %v2973 = vadd.f32 %v2972, %v2912
          %v2974 = vadd.f32 %v2973, %v2915
          %v2975 = vadd.f32 %v2974, %v2918
          %v2976 = vadd.f32 %v2975, %v2921
          %v2977 = vadd.f32 %v2976, %v2924
          %v2978 = vadd.f32 %v2977, %v2927
          %v2979 = vrot.slane %v2978, 4
          %v2980 = vadd.f32 %v2978, %v2979
          %v2981 = vrot.slane %v2980, 2
          %v2982 = vadd.f32 %v2980, %v2981
          %v2983 = vrot.slane %v2982, 1
          %v2984 = vadd.f32 %v2982, %v2983
          %v2985 = vadd.f32 %v2862, %v2865
          %v2986 = vadd.f32 %v2985, %v2868
          %v2987 = vadd.f32 %v2986, %v2871
          %v2988 = vadd.f32 %v2987, %v2874
          %v2989 = vadd.f32 %v2988, %v2877
          %v2990 = vadd.f32 %v2989, %v2880
          %v2991 = vadd.f32 %v2990, %v2883
          %v2992 = vadd.f32 %v2991, %v2886
          %v2993 = vadd.f32 %v2992, %v2889
          %v2994 = vadd.f32 %v2993, %v2892
          %v2995 = vadd.f32 %v2994, %v2895
          %v2996 = vadd.f32 %v2995, %v2898
          %v2997 = vadd.f32 %v2996, %v2901
          %v2998 = vadd.f32 %v2997, %v2904
          %v2999 = vadd.f32 %v2998, %v2907
          %v3000 = vadd.f32 %v2999, %v2910
          %v3001 = vadd.f32 %v3000, %v2913
          %v3002 = vadd.f32 %v3001, %v2916
          %v3003 = vadd.f32 %v3002, %v2919
          %v3004 = vadd.f32 %v3003, %v2922
          %v3005 = vadd.f32 %v3004, %v2925
          %v3006 = vadd.f32 %v3005, %v2928
          %v3007 = vrot.slane %v3006, 4
          %v3008 = vadd.f32 %v3006, %v3007
          %v3009 = vrot.slane %v3008, 2
          %v3010 = vadd.f32 %v3008, %v3009
          %v3011 = vrot.slane %v3010, 1
          %v3012 = vadd.f32 %v3010, %v3011
          %v3013 = vld [vmem:[#allocation2] sm:$0x7]
          %v3017 = vrot.slane %v2984, 7
          %v3018 = vrot.slane %v3012, 6
          %vm3019 = vcmask 1040384
          %v3020 = vsel %vm3019, %v2956, %v3017
          %vm3021 = vcmask 1041408
          %v3022 = vsel %vm3021, %v3020, %v3018
          %v3024 = vadd.f32 %v3013, %v3022
          %v3025 = vlaneseq
          %vm3026 = vcmp.ge.s32.totalorder %v3025, 0
          %vm3027 = vcmp.lt.s32.totalorder %v3025, 384
          %vm3028 = vmand %vm3026, %vm3027
          %3029 = vst.msk [vmem:[#allocation2] sm:$0x7] %vm3028, %v3024
        $region44: #{tpu_custom_call.1} parent=31 // pred_fallthru
          _
        // Predicated region
        $region45: #{tpu_custom_call.1} parent=31 // pred_check
          %p3030 = pneg %p229
        $region46: #{tpu_custom_call.1} parent=31 // pred_check_branch
          %3032 = sbr.rel (%p3030) target = $region48
        $region47: #{tpu_custom_call.1} parent=31 // pred_region
          %v3033 = vld [vmem:[#allocation2] sm:$0x7]
          %v3035 = vperm.slane %v3033, 0
          %v3036 = vperm.slane %v3033, 1
          %v3037 = vperm.slane %v3033, 2
          %vm3041 = vcmask 1040384
          %v3042 = vsel %vm3041, %v3035, 0.0
          %v3043 = vsel %vm3041, %v3036, 0.0
          %v3044 = vadd.f32 %v3042, %v3043
          %v3045 = vsel %vm3041, %v3037, 0.0
          %v3046 = vadd.f32 %v3044, %v3045
          %3047 = vadd.xlane.f32.xlu0 %v3046
          %v3048 = vpop.xlane.xlu0 %3047
          %v3049 = vrot.slane %v3048, 4
          %v3050 = vadd.f32 %v3048, %v3049
          %v3051 = vrot.slane %v3050, 2
          %v3052 = vadd.f32 %v3050, %v3051
          %v3053 = vrot.slane %v3052, 1
          %v3054 = vadd.f32 %v3052, %v3053
          %s3055 = vtos %v3054
          %v3056 = vstv %s3055
          %v3057 = vadd.f32 %v3056, 0.0
          %3058 = vst [vmem:[%s208] sm:$0xff] %v3057
        $region48: #{tpu_custom_call.1} parent=31 // pred_fallthru
          _
        %s3059 = sand.u32 %s115, 1
        %s3060 = scalar_lea.sflag [#allocation4], %s3059
        %s3061 = sand.u32 %s115, 1
        %s3062 = smul.addr %s3061, 8
        %s3063 = scalar_lea.vmem [#allocation3], %s3062
        // Predicated region
        $region49: #{tpu_custom_call.1} parent=31 // pred_check
          %p3064 = pneg %p125
        $region50: #{tpu_custom_call.1} parent=31 // pred_check_branch
          %3066 = sbr.rel (%p3064) target = $region52
        $region51: #{tpu_custom_call.1} parent=31 // pred_region
          %3068 = vsyncadd %s3060, 0
          %s3069 = smul.addr %s21, 8
          %s3070 = scalar_lea.hbm %s3, %s3069
          %s3072 = sshll.u32 %s3063, 4
          %s3073 = int_to_ptr.vmem [resolvable:$true] %s3072
          %s3074 = sshll.u32 %s3070, 4
          %s3075 = int_to_ptr.hbm [resolvable:$true] %s3074
          %3077 = dma.vmem_to_hbm [thread:$0]  %s3073, 128, %s3075, %s3060
        $region52: #{tpu_custom_call.1} parent=31 // pred_fallthru
          _
      $region32: #{tpu_custom_call.1} parent=5 // pred_fallthru
        _
      %p3078 = scmp.le.s32.totalorder 2, %s12
      // Predicated region
      $region53: #{tpu_custom_call.1} parent=5 // pred_check
        %p3079 = pneg %p3078
      $region54: #{tpu_custom_call.1} parent=5 // pred_check_branch
        %3081 = sbr.rel (%p3079) target = $region56
      $region55: #{tpu_custom_call.1} parent=5 // pred_region
        %s3082 = ssub.s32 %s12, 2
        // Predicated region
        $region57: #{tpu_custom_call.1} parent=55 // pred_check
          %p3083 = pneg %p131
        $region58: #{tpu_custom_call.1} parent=55 // pred_check_branch
          %3085 = sbr.rel (%p3083) target = $region60
        $region59: #{tpu_custom_call.1} parent=55 // pred_region
          %s3086 = sand.u32 %s116, 1
          %s3087 = scalar_lea.sflag [#allocation4], %s3086
          %s3088 = sand.u32 %s116, 1
          %s3089 = smul.addr %s3088, 8
          %s3090 = scalar_lea.vmem [#allocation3], %s3089
          %3092 = dma.done %s3087, 128
        $region60: #{tpu_custom_call.1} parent=55 // pred_fallthru
          _
      $region56: #{tpu_custom_call.1} parent=5 // pred_fallthru
        _
    $region6: #{tpu_custom_call.1} parent=1 // loop_footer
      %s16 = sadd.s32 1, %s12
    $region7: #{tpu_custom_call.1} parent=1 // loop_footer_branch
      %11 = sbr.rel target = $region3
    $region8: #{tpu_custom_call.1} parent=1 // loop_exit
      _
    %3093 = vsyncpa [#allocation4], 1
    %s3094 = scalar_lea.sflag [#allocation4], 1
    %3095 = vsyncpa %s3094, 1

</llo_original>
